<compile_context>
chip_gen: v7x
topology: tpu7x:2x2x1
jax: 0.10.0
libtpu: 0.0.40
codegen_flags: <defaults>
</compile_context>

<pallas_src>
import jax
import jax.numpy as jnp
from jax.experimental import pallas as pl
from jax.experimental.pallas import tpu as pltpu


def custom_net_kernel(x_ref, rec_ref, att_ref, head_ref, out_ref, alphas_ref):
    f32 = jnp.float32
    B, T = alphas_ref.shape                      # padded batch, seq len
    H = rec_ref.shape[1] // 8                    # hidden size (block width = 8H)
    I = rec_ref.shape[0] - 2 * H                 # input size
    TH = T * H
    TA = att_ref.shape[1]                        # T * attention_dim

    # ---- weight slices (static, tile-aligned row offsets) ------------------
    wih0 = rec_ref[0:I, 0:4 * H]                 # (I, 4H)  layer-0 input proj
    wblk = rec_ref[I:I + 2 * H, :]               # (2H, 8H) fused per-step weight
    b0 = head_ref[0:1, :]                        # (1, 4H)  b_ih0 + b_hh0 (g x2)
    b1 = head_ref[1:2, :]                        # (1, 4H)  b_ih1 + b_hh1 (g x2)

    # ---- hoisted layer-0 input projection: one matmul for all T steps ------
    xw0 = jnp.dot(x_ref[...], wih0, preferred_element_type=f32) + b0   # (T*B, 4H)

    def lstm_step(gates, c_prev):
        # The g-gate pre-activation arrives pre-scaled by 2 (wrapper fold), so
        # the single full-vreg sigmoid also provides tanh via 2*sigmoid(2x)-1:
        # 2 EUP pushes per layer-step instead of 3.
        sg = jax.nn.sigmoid(gates)                               # (B, 4H)
        g = 2.0 * sg[:, 2 * H:3 * H] - 1.0                       # tanh(g_pre)
        c_new = sg[:, H:2 * H] * c_prev + sg[:, 0:H] * g
        h_new = sg[:, 3 * H:4 * H] * jnp.tanh(c_new)
        return h_new, c_new

    c0 = jnp.zeros((B, H), f32)
    c1 = jnp.zeros((B, H), f32)
    h1 = jnp.zeros((B, H), f32)
    rec0 = jnp.zeros((B, 4 * H), f32)            # h0_{-1} @ Whh0 == 0

    # ---- fused 2-layer recurrence: one MXU push per step, fully unrolled ---
    h1_steps = []
    for t in range(T):
        g0 = xw0[t * B:(t + 1) * B, :] + rec0                    # (B, 4H)
        h0, c0 = lstm_step(g0, c0)
        blk = jnp.dot(jnp.concatenate([h0, h1], axis=1), wblk,
                      preferred_element_type=f32)                # (B, 8H)
        rec0 = blk[:, 4 * H:8 * H]               # h0_t @ Whh0, used at t+1
        h1, c1 = lstm_step(blk[:, 0:4 * H] + b1, c1)
        h1_steps.append(h1)

    # ---- attention on a lane-dense (B, T*H) slab with block-diag weights ---
    slab = jnp.concatenate(h1_steps, axis=1)                     # (B, T*H)
    wproj_blk = att_ref[0:TH, :]                                 # (T*H, T*A)
    watt_blk = att_ref[TH:TH + TA, 0:T]                          # (T*A, T)
    bproj = att_ref[TH + TA:TH + TA + 1, :]                      # (1, T*A)

    proj = jnp.maximum(
        jnp.dot(slab, wproj_blk, preferred_element_type=f32) + bproj, 0.0)
    # b_att omitted: a constant added to every score cancels in the softmax.
    scores = jnp.dot(proj, watt_blk, preferred_element_type=f32)  # (B, T)

    # softmax over time, already in the (B, T) output layout: one exp push,
    # no re-stacking, no trailing transpose.
    e = jnp.exp(scores - jnp.max(scores, axis=1, keepdims=True))
    alphas = e / jnp.sum(e, axis=1, keepdims=True)               # (B, T)
    alphas_ref[...] = alphas.astype(alphas_ref.dtype)

    # ---- attention-weighted encoding: z = sum_t alpha_t * h1_t -------------
    z = h1_steps[0] * alphas[:, 0:1]
    for t in range(1, T):
        z = z + h1_steps[t] * alphas[:, t:t + 1]                 # (B, H)

    # ---- MLP head: Linear -> ReLU -> (Dropout = eval identity) -> Linear ---
    # TODO(synk): nn.Dropout is treated as eval-mode identity (no RNG mask).
    wmlp1 = head_ref[8:8 + H, 0:H]               # (H, H)
    wmlp2 = head_ref[8:8 + H, H:H + 2]           # (H, 2)
    bmlp1 = head_ref[2:3, 0:H]                   # (1, H)
    bmlp2 = head_ref[2:3, H:H + 2]               # (1, 2)
    m1 = jnp.maximum(jnp.dot(z, wmlp1, preferred_element_type=f32) + bmlp1, 0.0)
    out = jnp.dot(m1, wmlp2, preferred_element_type=f32) + bmlp2
    out_ref[...] = out.astype(out_ref.dtype)


def init_params(key, input_size, num_hiddens, attention_dim):
    """Deterministic init mimicking PyTorch default U(-1/sqrt(fan_in), +...)."""
    H, I, A = num_hiddens, input_size, attention_dim
    ks = jax.random.split(key, 16)

    def u(k, shape, fan_in):
        bound = 1.0 / jnp.sqrt(jnp.float32(fan_in))
        return jax.random.uniform(k, shape, jnp.float32, -bound, bound)

    p = {}
    # LSTM layer 0
    p["w_ih0"] = u(ks[0], (4 * H, I), H)
    p["w_hh0"] = u(ks[1], (4 * H, H), H)
    p["b_ih0"] = u(ks[2], (4 * H,), H)
    p["b_hh0"] = u(ks[3], (4 * H,), H)
    # LSTM layer 1
    p["w_ih1"] = u(ks[4], (4 * H, H), H)
    p["w_hh1"] = u(ks[5], (4 * H, H), H)
    p["b_ih1"] = u(ks[6], (4 * H,), H)
    p["b_hh1"] = u(ks[7], (4 * H,), H)
    # attention
    p["w_proj"] = u(ks[8], (A, H), H)
    p["b_proj"] = u(ks[9], (A,), H)
    p["w_att"] = u(ks[10], (1, A), A)
    p["b_att"] = u(ks[11], (1,), A)
    # MLP
    p["w_mlp1"] = u(ks[12], (H, H), H)
    p["b_mlp1"] = u(ks[13], (H,), H)
    p["w_mlp2"] = u(ks[14], (2, H), H)
    p["b_mlp2"] = u(ks[15], (2,), H)
    return p


def _pack_operands(x, params):
    """Pad batch to 8, flatten time-major, and pack 15 params into 3 slabs."""
    B, T, I = x.shape
    H = params["w_hh0"].shape[1]
    B_pad = max(8, ((B + 7) // 8) * 8)           # full f32 sublane occupancy

    # time-major, batch-padded (zeros), flattened input: (T*B_pad, I)
    x_t = jnp.transpose(x, (1, 0, 2)).astype(jnp.float32)
    x_t = jnp.pad(x_t, ((0, 0), (0, B_pad - B), (0, 0)))
    x_flat = x_t.reshape(T * B_pad, I)

    def gx2(w):  # double the g-gate columns (tanh -> 2*sigmoid(2x)-1 fold)
        return w.astype(jnp.float32).at[:, 2 * H:3 * H].multiply(2.0)

    wih0 = gx2(params["w_ih0"].T)                # (I, 4H)
    whh0 = gx2(params["w_hh0"].T)                # (H, 4H)
    wih1 = gx2(params["w_ih1"].T)                # (H, 4H)
    whh1 = gx2(params["w_hh1"].T)                # (H, 4H)
    b0 = gx2((params["b_ih0"] + params["b_hh0"]).reshape(1, 4 * H))
    b1 = gx2((params["b_ih1"] + params["b_hh1"]).reshape(1, 4 * H))

    # --- recurrence slab (I + 2H, 8H) ----------------------------------------
    # rows 0:I      -> [ w_ih0 | 0     ]  (hoisted input projection)
    # rows I:I+H    -> [ w_ih1 | w_hh0 ]  (h0 rows of the fused step weight)
    # rows I+H:I+2H -> [ w_hh1 | 0     ]  (h1 rows)
    rec_slab = jnp.concatenate([
        jnp.concatenate([wih0, jnp.zeros((I, 4 * H), jnp.float32)], axis=1),
        jnp.concatenate([wih1, whh0], axis=1),
        jnp.concatenate([whh1, jnp.zeros((H, 4 * H), jnp.float32)], axis=1),
    ], axis=0)                                    # (I + 2H, 8H)

    # --- attention slab: block-diagonal weights so scores land in (B, T) -----
    A = params["w_proj"].shape[0]
    eye_t = jnp.eye(T, dtype=jnp.float32)
    wproj_blk = jnp.kron(eye_t, params["w_proj"].T.astype(jnp.float32))  # (T*H, T*A)
    watt_blk = jnp.kron(eye_t, params["w_att"].T.astype(jnp.float32))    # (T*A, T)
    bproj_tiled = jnp.tile(params["b_proj"].astype(jnp.float32), T)      # (T*A,)
    att_rows = ((T * H + T * A + 1 + 7) // 8) * 8
    att_slab = jnp.zeros((att_rows, T * A), jnp.float32)
    att_slab = att_slab.at[0:T * H, :].set(wproj_blk)
    att_slab = att_slab.at[T * H:T * H + T * A, 0:T].set(watt_blk)
    att_slab = att_slab.at[T * H + T * A, :].set(bproj_tiled)
    # b_att intentionally dropped: softmax is invariant to a constant shift.

    # --- head slab (8 + H, 4H): biases + MLP weights --------------------------
    head_slab = jnp.zeros((8 + H, 4 * H), jnp.float32)
    head_slab = head_slab.at[0, :].set(b0[0])
    head_slab = head_slab.at[1, :].set(b1[0])
    head_slab = head_slab.at[2, 0:H].set(params["b_mlp1"].astype(jnp.float32))
    head_slab = head_slab.at[2, H:H + 2].set(params["b_mlp2"].astype(jnp.float32))
    head_slab = head_slab.at[8:8 + H, 0:H].set(params["w_mlp1"].T.astype(jnp.float32))
    head_slab = head_slab.at[8:8 + H, H:H + 2].set(params["w_mlp2"].T.astype(jnp.float32))

    return x_flat, rec_slab, att_slab, head_slab, B_pad


def custom_net_forward(x, params):
    """x: [B, T, input_size] float32 -> (out [B, 2], alphas [B, T])."""
    B, T, _ = x.shape
    x_flat, rec_slab, att_slab, head_slab, B_pad = _pack_operands(x, params)

    vmem = pl.BlockSpec(memory_space=pltpu.MemorySpace.VMEM)
    out_pad, alphas_pad = pl.pallas_call(
        custom_net_kernel,
        out_shape=(
            jax.ShapeDtypeStruct((B_pad, 2), jnp.float32),
            jax.ShapeDtypeStruct((B_pad, T), jnp.float32),
        ),
        in_specs=[vmem, vmem, vmem, vmem],
        out_specs=(vmem, vmem),
    )(x_flat, rec_slab, att_slab, head_slab)
    return out_pad[:B], alphas_pad[:B]


def reference_forward(x, params):
    """Pure-JAX reference of CustomNet.forward (eval mode)."""
    B, T, _ = x.shape
    H = params["w_hh0"].shape[1]

    def lstm_layer(inp, w_ih, w_hh, b_ih, b_hh):
        h = jnp.zeros((B, H), jnp.float32)
        c = jnp.zeros((B, H), jnp.float32)
        outs = []
        for t in range(inp.shape[1]):
            gates = inp[:, t, :] @ w_ih.T + h @ w_hh.T + b_ih + b_hh
            i_ = jax.nn.sigmoid(gates[:, 0:H])
            f_ = jax.nn.sigmoid(gates[:, H:2 * H])
            g_ = jnp.tanh(gates[:, 2 * H:3 * H])
            o_ = jax.nn.sigmoid(gates[:, 3 * H:4 * H])
            c = f_ * c + i_ * g_
            h = o_ * jnp.tanh(c)
            outs.append(h)
        return jnp.stack(outs, axis=1)           # (B, T, H)

    h1 = lstm_layer(x, params["w_ih0"], params["w_hh0"],
                    params["b_ih0"], params["b_hh0"])
    h2 = lstm_layer(h1, params["w_ih1"], params["w_hh1"],
                    params["b_ih1"], params["b_hh1"])
    proj = jnp.maximum(h2 @ params["w_proj"].T + params["b_proj"], 0.0)
    att = (proj @ params["w_att"].T + params["b_att"])[..., 0]   # (B, T)
    alphas = jax.nn.softmax(att, axis=1)
    z = jnp.sum(h2 * alphas[..., None], axis=1)                  # (B, H)
    m1 = jnp.maximum(z @ params["w_mlp1"].T + params["b_mlp1"], 0.0)
    out = m1 @ params["w_mlp2"].T + params["b_mlp2"]
    return out, alphas


if __name__ == "__main__":
    # small shapes consistent with the module
    batch, seq_len, input_size = 2, 8, 16
    num_hiddens, num_layers, attention_dim = 32, 2, 16
    dropout = 0.5  # eval-mode identity

    key = jax.random.PRNGKey(0)
    k_x, k_p = jax.random.split(key)
    x = jax.random.normal(k_x, (batch, seq_len, input_size), jnp.float32)
    params = init_params(k_p, input_size, num_hiddens, attention_dim)

    out, alphas = jax.jit(custom_net_forward)(x, params)
    jax.block_until_ready((out, alphas))

    assert out.shape == (batch, 2)
    assert alphas.shape == (batch, seq_len)
    # softmax over seq dim should sum to 1 per batch row
    assert jnp.allclose(jnp.sum(alphas, axis=1), 1.0, atol=1e-5)

    # pure-JAX reference check (default MXU precision -> loose tolerance)
    out_r, alphas_r = jax.jit(reference_forward)(x, params)
    assert jnp.allclose(out, out_r, atol=2e-2, rtol=2e-2), (
        "out mismatch, max abs diff = %f" % float(jnp.max(jnp.abs(out - out_r))))
    assert jnp.allclose(alphas, alphas_r, atol=2e-2, rtol=2e-2), (
        "alphas mismatch, max abs diff = %f"
        % float(jnp.max(jnp.abs(alphas - alphas_r))))

    print("KERNEL_OK")
</pallas_src>

<mosaic_0001>
module attributes {stable_mosaic.version = 11 : i64} {
  func.func @custom_net_kernel(%arg0: memref<64x16xf32, #tpu.memory_space<vmem>>, %arg1: memref<80x256xf32, #tpu.memory_space<vmem>>, %arg2: memref<392x128xf32, #tpu.memory_space<vmem>>, %arg3: memref<40x128xf32, #tpu.memory_space<vmem>>, %arg4: memref<8x2xf32, #tpu.memory_space<vmem>>, %arg5: memref<8x8xf32, #tpu.memory_space<vmem>>) attributes {dimension_semantics = [], scalar_prefetch = 0 : i64, scratch_operands = 0 : i64, tpu.core_type = #tpu.core_type<tc>} {
    %c0 = arith.constant 0 : index
    %c0_0 = arith.constant 0 : index
    %0 = vector.load %arg1[%c0, %c0_0] : memref<80x256xf32, #tpu.memory_space<vmem>>, vector<16x128xf32>
    %c16 = arith.constant 16 : index
    %c0_1 = arith.constant 0 : index
    %1 = vector.load %arg1[%c16, %c0_1] : memref<80x256xf32, #tpu.memory_space<vmem>>, vector<64x256xf32>
    %c0_2 = arith.constant 0 : index
    %c0_3 = arith.constant 0 : index
    %2 = vector.load %arg3[%c0_2, %c0_3] : memref<40x128xf32, #tpu.memory_space<vmem>>, vector<1x128xf32>
    %c1 = arith.constant 1 : index
    %c0_4 = arith.constant 0 : index
    %3 = vector.load %arg3[%c1, %c0_4] : memref<40x128xf32, #tpu.memory_space<vmem>>, vector<1x128xf32>
    %c0_5 = arith.constant 0 : index
    %c0_6 = arith.constant 0 : index
    %4 = vector.load %arg0[%c0_5, %c0_6] : memref<64x16xf32, #tpu.memory_space<vmem>>, vector<64x16xf32>
    %cst = arith.constant dense<0.000000e+00> : vector<64x128xf32>
    %5 = tpu.matmul %4, %0, %cst {dimension_numbers = #tpu.dot_dimension_numbers<[1], [0], [0], [1], [0, 0, 1, 1], [], []>} : vector<64x16xf32>, vector<16x128xf32>, vector<64x128xf32> -> vector<64x128xf32>
    %6 = vector.broadcast %2 : vector<1x128xf32> to vector<64x128xf32>
    %7 = arith.addf %5, %6 : vector<64x128xf32>
    %cst_7 = arith.constant 0.000000e+00 : f32
    %8 = vector.broadcast %cst_7 : f32 to vector<8x32xf32>
    %cst_8 = arith.constant 0.000000e+00 : f32
    %9 = vector.broadcast %cst_8 : f32 to vector<8x32xf32>
    %cst_9 = arith.constant 0.000000e+00 : f32
    %10 = vector.broadcast %cst_9 : f32 to vector<8x32xf32>
    %cst_10 = arith.constant 0.000000e+00 : f32
    %11 = vector.broadcast %cst_10 : f32 to vector<8x128xf32>
    %12 = vector.extract_strided_slice %7 {offsets = [0, 0], sizes = [8, 128], strides = [1, 1]} : vector<64x128xf32> to vector<8x128xf32>
    %13 = arith.addf %12, %11 : vector<8x128xf32>
    %14 = arith.negf %13 : vector<8x128xf32>
    %15 = math.exp %14 : vector<8x128xf32>
    %cst_11 = arith.constant 1.000000e+00 : f32
    %16 = vector.broadcast %cst_11 : f32 to vector<8x128xf32>
    %17 = arith.addf %16, %15 : vector<8x128xf32>
    %18 = arith.divf %16, %17 : vector<8x128xf32>
    %19 = vector.extract_strided_slice %18 {offsets = [0, 64], sizes = [8, 32], strides = [1, 1]} : vector<8x128xf32> to vector<8x32xf32>
    %cst_12 = arith.constant 2.000000e+00 : f32
    %20 = vector.broadcast %cst_12 : f32 to vector<8x32xf32>
    %21 = arith.mulf %20, %19 : vector<8x32xf32>
    %cst_13 = arith.constant 1.000000e+00 : f32
    %22 = vector.broadcast %cst_13 : f32 to vector<8x32xf32>
    %23 = arith.subf %21, %22 : vector<8x32xf32>
    %24 = vector.extract_strided_slice %18 {offsets = [0, 32], sizes = [8, 32], strides = [1, 1]} : vector<8x128xf32> to vector<8x32xf32>
    %25 = arith.mulf %24, %8 : vector<8x32xf32>
    %26 = vector.extract_strided_slice %18 {offsets = [0, 0], sizes = [8, 32], strides = [1, 1]} : vector<8x128xf32> to vector<8x32xf32>
    %27 = arith.mulf %26, %23 : vector<8x32xf32>
    %28 = arith.addf %25, %27 : vector<8x32xf32>
    %29 = vector.extract_strided_slice %18 {offsets = [0, 96], sizes = [8, 32], strides = [1, 1]} : vector<8x128xf32> to vector<8x32xf32>
    %30 = math.tanh %28 : vector<8x32xf32>
    %31 = arith.mulf %29, %30 : vector<8x32xf32>
    %32 = tpu.concatenate %31, %10 in 1 : vector<8x32xf32>, vector<8x32xf32> -> vector<8x64xf32>
    %cst_14 = arith.constant dense<0.000000e+00> : vector<8x256xf32>
    %33 = tpu.matmul %32, %1, %cst_14 {dimension_numbers = #tpu.dot_dimension_numbers<[1], [0], [0], [1], [0, 0, 1, 1], [], []>} : vector<8x64xf32>, vector<64x256xf32>, vector<8x256xf32> -> vector<8x256xf32>
    %34 = vector.extract_strided_slice %33 {offsets = [0, 128], sizes = [8, 128], strides = [1, 1]} : vector<8x256xf32> to vector<8x128xf32>
    %35 = vector.extract_strided_slice %33 {offsets = [0, 0], sizes = [8, 128], strides = [1, 1]} : vector<8x256xf32> to vector<8x128xf32>
    %36 = vector.broadcast %3 : vector<1x128xf32> to vector<8x128xf32>
    %37 = arith.addf %35, %36 : vector<8x128xf32>
    %38 = arith.negf %37 : vector<8x128xf32>
    %39 = math.exp %38 : vector<8x128xf32>
    %cst_15 = arith.constant 1.000000e+00 : f32
    %40 = vector.broadcast %cst_15 : f32 to vector<8x128xf32>
    %41 = arith.addf %40, %39 : vector<8x128xf32>
    %42 = arith.divf %40, %41 : vector<8x128xf32>
    %43 = vector.extract_strided_slice %42 {offsets = [0, 64], sizes = [8, 32], strides = [1, 1]} : vector<8x128xf32> to vector<8x32xf32>
    %cst_16 = arith.constant 2.000000e+00 : f32
    %44 = vector.broadcast %cst_16 : f32 to vector<8x32xf32>
    %45 = arith.mulf %44, %43 : vector<8x32xf32>
    %cst_17 = arith.constant 1.000000e+00 : f32
    %46 = vector.broadcast %cst_17 : f32 to vector<8x32xf32>
    %47 = arith.subf %45, %46 : vector<8x32xf32>
    %48 = vector.extract_strided_slice %42 {offsets = [0, 32], sizes = [8, 32], strides = [1, 1]} : vector<8x128xf32> to vector<8x32xf32>
    %49 = arith.mulf %48, %9 : vector<8x32xf32>
    %50 = vector.extract_strided_slice %42 {offsets = [0, 0], sizes = [8, 32], strides = [1, 1]} : vector<8x128xf32> to vector<8x32xf32>
    %51 = arith.mulf %50, %47 : vector<8x32xf32>
    %52 = arith.addf %49, %51 : vector<8x32xf32>
    %53 = vector.extract_strided_slice %42 {offsets = [0, 96], sizes = [8, 32], strides = [1, 1]} : vector<8x128xf32> to vector<8x32xf32>
    %54 = math.tanh %52 : vector<8x32xf32>
    %55 = arith.mulf %53, %54 : vector<8x32xf32>
    %56 = vector.extract_strided_slice %7 {offsets = [8, 0], sizes = [8, 128], strides = [1, 1]} : vector<64x128xf32> to vector<8x128xf32>
    %57 = arith.addf %56, %34 : vector<8x128xf32>
    %58 = arith.negf %57 : vector<8x128xf32>
    %59 = math.exp %58 : vector<8x128xf32>
    %cst_18 = arith.constant 1.000000e+00 : f32
    %60 = vector.broadcast %cst_18 : f32 to vector<8x128xf32>
    %61 = arith.addf %60, %59 : vector<8x128xf32>
    %62 = arith.divf %60, %61 : vector<8x128xf32>
    %63 = vector.extract_strided_slice %62 {offsets = [0, 64], sizes = [8, 32], strides = [1, 1]} : vector<8x128xf32> to vector<8x32xf32>
    %cst_19 = arith.constant 2.000000e+00 : f32
    %64 = vector.broadcast %cst_19 : f32 to vector<8x32xf32>
    %65 = arith.mulf %64, %63 : vector<8x32xf32>
    %cst_20 = arith.constant 1.000000e+00 : f32
    %66 = vector.broadcast %cst_20 : f32 to vector<8x32xf32>
    %67 = arith.subf %65, %66 : vector<8x32xf32>
    %68 = vector.extract_strided_slice %62 {offsets = [0, 32], sizes = [8, 32], strides = [1, 1]} : vector<8x128xf32> to vector<8x32xf32>
    %69 = arith.mulf %68, %28 : vector<8x32xf32>
    %70 = vector.extract_strided_slice %62 {offsets = [0, 0], sizes = [8, 32], strides = [1, 1]} : vector<8x128xf32> to vector<8x32xf32>
    %71 = arith.mulf %70, %67 : vector<8x32xf32>
    %72 = arith.addf %69, %71 : vector<8x32xf32>
    %73 = vector.extract_strided_slice %62 {offsets = [0, 96], sizes = [8, 32], strides = [1, 1]} : vector<8x128xf32> to vector<8x32xf32>
    %74 = math.tanh %72 : vector<8x32xf32>
    %75 = arith.mulf %73, %74 : vector<8x32xf32>
    %76 = tpu.concatenate %75, %55 in 1 : vector<8x32xf32>, vector<8x32xf32> -> vector<8x64xf32>
    %cst_21 = arith.constant dense<0.000000e+00> : vector<8x256xf32>
    %77 = tpu.matmul %76, %1, %cst_21 {dimension_numbers = #tpu.dot_dimension_numbers<[1], [0], [0], [1], [0, 0, 1, 1], [], []>} : vector<8x64xf32>, vector<64x256xf32>, vector<8x256xf32> -> vector<8x256xf32>
    %78 = vector.extract_strided_slice %77 {offsets = [0, 128], sizes = [8, 128], strides = [1, 1]} : vector<8x256xf32> to vector<8x128xf32>
    %79 = vector.extract_strided_slice %77 {offsets = [0, 0], sizes = [8, 128], strides = [1, 1]} : vector<8x256xf32> to vector<8x128xf32>
    %80 = vector.broadcast %3 : vector<1x128xf32> to vector<8x128xf32>
    %81 = arith.addf %79, %80 : vector<8x128xf32>
    %82 = arith.negf %81 : vector<8x128xf32>
    %83 = math.exp %82 : vector<8x128xf32>
    %cst_22 = arith.constant 1.000000e+00 : f32
    %84 = vector.broadcast %cst_22 : f32 to vector<8x128xf32>
    %85 = arith.addf %84, %83 : vector<8x128xf32>
    %86 = arith.divf %84, %85 : vector<8x128xf32>
    %87 = vector.extract_strided_slice %86 {offsets = [0, 64], sizes = [8, 32], strides = [1, 1]} : vector<8x128xf32> to vector<8x32xf32>
    %cst_23 = arith.constant 2.000000e+00 : f32
    %88 = vector.broadcast %cst_23 : f32 to vector<8x32xf32>
    %89 = arith.mulf %88, %87 : vector<8x32xf32>
    %cst_24 = arith.constant 1.000000e+00 : f32
    %90 = vector.broadcast %cst_24 : f32 to vector<8x32xf32>
    %91 = arith.subf %89, %90 : vector<8x32xf32>
    %92 = vector.extract_strided_slice %86 {offsets = [0, 32], sizes = [8, 32], strides = [1, 1]} : vector<8x128xf32> to vector<8x32xf32>
    %93 = arith.mulf %92, %52 : vector<8x32xf32>
    %94 = vector.extract_strided_slice %86 {offsets = [0, 0], sizes = [8, 32], strides = [1, 1]} : vector<8x128xf32> to vector<8x32xf32>
    %95 = arith.mulf %94, %91 : vector<8x32xf32>
    %96 = arith.addf %93, %95 : vector<8x32xf32>
    %97 = vector.extract_strided_slice %86 {offsets = [0, 96], sizes = [8, 32], strides = [1, 1]} : vector<8x128xf32> to vector<8x32xf32>
    %98 = math.tanh %96 : vector<8x32xf32>
    %99 = arith.mulf %97, %98 : vector<8x32xf32>
    %100 = vector.extract_strided_slice %7 {offsets = [16, 0], sizes = [8, 128], strides = [1, 1]} : vector<64x128xf32> to vector<8x128xf32>
    %101 = arith.addf %100, %78 : vector<8x128xf32>
    %102 = arith.negf %101 : vector<8x128xf32>
    %103 = math.exp %102 : vector<8x128xf32>
    %cst_25 = arith.constant 1.000000e+00 : f32
    %104 = vector.broadcast %cst_25 : f32 to vector<8x128xf32>
    %105 = arith.addf %104, %103 : vector<8x128xf32>
    %106 = arith.divf %104, %105 : vector<8x128xf32>
    %107 = vector.extract_strided_slice %106 {offsets = [0, 64], sizes = [8, 32], strides = [1, 1]} : vector<8x128xf32> to vector<8x32xf32>
    %cst_26 = arith.constant 2.000000e+00 : f32
    %108 = vector.broadcast %cst_26 : f32 to vector<8x32xf32>
    %109 = arith.mulf %108, %107 : vector<8x32xf32>
    %cst_27 = arith.constant 1.000000e+00 : f32
    %110 = vector.broadcast %cst_27 : f32 to vector<8x32xf32>
    %111 = arith.subf %109, %110 : vector<8x32xf32>
    %112 = vector.extract_strided_slice %106 {offsets = [0, 32], sizes = [8, 32], strides = [1, 1]} : vector<8x128xf32> to vector<8x32xf32>
    %113 = arith.mulf %112, %72 : vector<8x32xf32>
    %114 = vector.extract_strided_slice %106 {offsets = [0, 0], sizes = [8, 32], strides = [1, 1]} : vector<8x128xf32> to vector<8x32xf32>
    %115 = arith.mulf %114, %111 : vector<8x32xf32>
    %116 = arith.addf %113, %115 : vector<8x32xf32>
    %117 = vector.extract_strided_slice %106 {offsets = [0, 96], sizes = [8, 32], strides = [1, 1]} : vector<8x128xf32> to vector<8x32xf32>
    %118 = math.tanh %116 : vector<8x32xf32>
    %119 = arith.mulf %117, %118 : vector<8x32xf32>
    %120 = tpu.concatenate %119, %99 in 1 : vector<8x32xf32>, vector<8x32xf32> -> vector<8x64xf32>
    %cst_28 = arith.constant dense<0.000000e+00> : vector<8x256xf32>
    %121 = tpu.matmul %120, %1, %cst_28 {dimension_numbers = #tpu.dot_dimension_numbers<[1], [0], [0], [1], [0, 0, 1, 1], [], []>} : vector<8x64xf32>, vector<64x256xf32>, vector<8x256xf32> -> vector<8x256xf32>
    %122 = vector.extract_strided_slice %121 {offsets = [0, 128], sizes = [8, 128], strides = [1, 1]} : vector<8x256xf32> to vector<8x128xf32>
    %123 = vector.extract_strided_slice %121 {offsets = [0, 0], sizes = [8, 128], strides = [1, 1]} : vector<8x256xf32> to vector<8x128xf32>
    %124 = vector.broadcast %3 : vector<1x128xf32> to vector<8x128xf32>
    %125 = arith.addf %123, %124 : vector<8x128xf32>
    %126 = arith.negf %125 : vector<8x128xf32>
    %127 = math.exp %126 : vector<8x128xf32>
    %cst_29 = arith.constant 1.000000e+00 : f32
    %128 = vector.broadcast %cst_29 : f32 to vector<8x128xf32>
    %129 = arith.addf %128, %127 : vector<8x128xf32>
    %130 = arith.divf %128, %129 : vector<8x128xf32>
    %131 = vector.extract_strided_slice %130 {offsets = [0, 64], sizes = [8, 32], strides = [1, 1]} : vector<8x128xf32> to vector<8x32xf32>
    %cst_30 = arith.constant 2.000000e+00 : f32
    %132 = vector.broadcast %cst_30 : f32 to vector<8x32xf32>
    %133 = arith.mulf %132, %131 : vector<8x32xf32>
    %cst_31 = arith.constant 1.000000e+00 : f32
    %134 = vector.broadcast %cst_31 : f32 to vector<8x32xf32>
    %135 = arith.subf %133, %134 : vector<8x32xf32>
    %136 = vector.extract_strided_slice %130 {offsets = [0, 32], sizes = [8, 32], strides = [1, 1]} : vector<8x128xf32> to vector<8x32xf32>
    %137 = arith.mulf %136, %96 : vector<8x32xf32>
    %138 = vector.extract_strided_slice %130 {offsets = [0, 0], sizes = [8, 32], strides = [1, 1]} : vector<8x128xf32> to vector<8x32xf32>
    %139 = arith.mulf %138, %135 : vector<8x32xf32>
    %140 = arith.addf %137, %139 : vector<8x32xf32>
    %141 = vector.extract_strided_slice %130 {offsets = [0, 96], sizes = [8, 32], strides = [1, 1]} : vector<8x128xf32> to vector<8x32xf32>
    %142 = math.tanh %140 : vector<8x32xf32>
    %143 = arith.mulf %141, %142 : vector<8x32xf32>
    %144 = vector.extract_strided_slice %7 {offsets = [24, 0], sizes = [8, 128], strides = [1, 1]} : vector<64x128xf32> to vector<8x128xf32>
    %145 = arith.addf %144, %122 : vector<8x128xf32>
    %146 = arith.negf %145 : vector<8x128xf32>
    %147 = math.exp %146 : vector<8x128xf32>
    %cst_32 = arith.constant 1.000000e+00 : f32
    %148 = vector.broadcast %cst_32 : f32 to vector<8x128xf32>
    %149 = arith.addf %148, %147 : vector<8x128xf32>
    %150 = arith.divf %148, %149 : vector<8x128xf32>
    %151 = vector.extract_strided_slice %150 {offsets = [0, 64], sizes = [8, 32], strides = [1, 1]} : vector<8x128xf32> to vector<8x32xf32>
    %cst_33 = arith.constant 2.000000e+00 : f32
    %152 = vector.broadcast %cst_33 : f32 to vector<8x32xf32>
    %153 = arith.mulf %152, %151 : vector<8x32xf32>
    %cst_34 = arith.constant 1.000000e+00 : f32
    %154 = vector.broadcast %cst_34 : f32 to vector<8x32xf32>
    %155 = arith.subf %153, %154 : vector<8x32xf32>
    %156 = vector.extract_strided_slice %150 {offsets = [0, 32], sizes = [8, 32], strides = [1, 1]} : vector<8x128xf32> to vector<8x32xf32>
    %157 = arith.mulf %156, %116 : vector<8x32xf32>
    %158 = vector.extract_strided_slice %150 {offsets = [0, 0], sizes = [8, 32], strides = [1, 1]} : vector<8x128xf32> to vector<8x32xf32>
    %159 = arith.mulf %158, %155 : vector<8x32xf32>
    %160 = arith.addf %157, %159 : vector<8x32xf32>
    %161 = vector.extract_strided_slice %150 {offsets = [0, 96], sizes = [8, 32], strides = [1, 1]} : vector<8x128xf32> to vector<8x32xf32>
    %162 = math.tanh %160 : vector<8x32xf32>
    %163 = arith.mulf %161, %162 : vector<8x32xf32>
    %164 = tpu.concatenate %163, %143 in 1 : vector<8x32xf32>, vector<8x32xf32> -> vector<8x64xf32>
    %cst_35 = arith.constant dense<0.000000e+00> : vector<8x256xf32>
    %165 = tpu.matmul %164, %1, %cst_35 {dimension_numbers = #tpu.dot_dimension_numbers<[1], [0], [0], [1], [0, 0, 1, 1], [], []>} : vector<8x64xf32>, vector<64x256xf32>, vector<8x256xf32> -> vector<8x256xf32>
    %166 = vector.extract_strided_slice %165 {offsets = [0, 128], sizes = [8, 128], strides = [1, 1]} : vector<8x256xf32> to vector<8x128xf32>
    %167 = vector.extract_strided_slice %165 {offsets = [0, 0], sizes = [8, 128], strides = [1, 1]} : vector<8x256xf32> to vector<8x128xf32>
    %168 = vector.broadcast %3 : vector<1x128xf32> to vector<8x128xf32>
    %169 = arith.addf %167, %168 : vector<8x128xf32>
    %170 = arith.negf %169 : vector<8x128xf32>
    %171 = math.exp %170 : vector<8x128xf32>
    %cst_36 = arith.constant 1.000000e+00 : f32
    %172 = vector.broadcast %cst_36 : f32 to vector<8x128xf32>
    %173 = arith.addf %172, %171 : vector<8x128xf32>
    %174 = arith.divf %172, %173 : vector<8x128xf32>
    %175 = vector.extract_strided_slice %174 {offsets = [0, 64], sizes = [8, 32], strides = [1, 1]} : vector<8x128xf32> to vector<8x32xf32>
    %cst_37 = arith.constant 2.000000e+00 : f32
    %176 = vector.broadcast %cst_37 : f32 to vector<8x32xf32>
    %177 = arith.mulf %176, %175 : vector<8x32xf32>
    %cst_38 = arith.constant 1.000000e+00 : f32
    %178 = vector.broadcast %cst_38 : f32 to vector<8x32xf32>
    %179 = arith.subf %177, %178 : vector<8x32xf32>
    %180 = vector.extract_strided_slice %174 {offsets = [0, 32], sizes = [8, 32], strides = [1, 1]} : vector<8x128xf32> to vector<8x32xf32>
    %181 = arith.mulf %180, %140 : vector<8x32xf32>
    %182 = vector.extract_strided_slice %174 {offsets = [0, 0], sizes = [8, 32], strides = [1, 1]} : vector<8x128xf32> to vector<8x32xf32>
    %183 = arith.mulf %182, %179 : vector<8x32xf32>
    %184 = arith.addf %181, %183 : vector<8x32xf32>
    %185 = vector.extract_strided_slice %174 {offsets = [0, 96], sizes = [8, 32], strides = [1, 1]} : vector<8x128xf32> to vector<8x32xf32>
    %186 = math.tanh %184 : vector<8x32xf32>
    %187 = arith.mulf %185, %186 : vector<8x32xf32>
    %188 = vector.extract_strided_slice %7 {offsets = [32, 0], sizes = [8, 128], strides = [1, 1]} : vector<64x128xf32> to vector<8x128xf32>
    %189 = arith.addf %188, %166 : vector<8x128xf32>
    %190 = arith.negf %189 : vector<8x128xf32>
    %191 = math.exp %190 : vector<8x128xf32>
    %cst_39 = arith.constant 1.000000e+00 : f32
    %192 = vector.broadcast %cst_39 : f32 to vector<8x128xf32>
    %193 = arith.addf %192, %191 : vector<8x128xf32>
    %194 = arith.divf %192, %193 : vector<8x128xf32>
    %195 = vector.extract_strided_slice %194 {offsets = [0, 64], sizes = [8, 32], strides = [1, 1]} : vector<8x128xf32> to vector<8x32xf32>
    %cst_40 = arith.constant 2.000000e+00 : f32
    %196 = vector.broadcast %cst_40 : f32 to vector<8x32xf32>
    %197 = arith.mulf %196, %195 : vector<8x32xf32>
    %cst_41 = arith.constant 1.000000e+00 : f32
    %198 = vector.broadcast %cst_41 : f32 to vector<8x32xf32>
    %199 = arith.subf %197, %198 : vector<8x32xf32>
    %200 = vector.extract_strided_slice %194 {offsets = [0, 32], sizes = [8, 32], strides = [1, 1]} : vector<8x128xf32> to vector<8x32xf32>
    %201 = arith.mulf %200, %160 : vector<8x32xf32>
    %202 = vector.extract_strided_slice %194 {offsets = [0, 0], sizes = [8, 32], strides = [1, 1]} : vector<8x128xf32> to vector<8x32xf32>
    %203 = arith.mulf %202, %199 : vector<8x32xf32>
    %204 = arith.addf %201, %203 : vector<8x32xf32>
    %205 = vector.extract_strided_slice %194 {offsets = [0, 96], sizes = [8, 32], strides = [1, 1]} : vector<8x128xf32> to vector<8x32xf32>
    %206 = math.tanh %204 : vector<8x32xf32>
    %207 = arith.mulf %205, %206 : vector<8x32xf32>
    %208 = tpu.concatenate %207, %187 in 1 : vector<8x32xf32>, vector<8x32xf32> -> vector<8x64xf32>
    %cst_42 = arith.constant dense<0.000000e+00> : vector<8x256xf32>
    %209 = tpu.matmul %208, %1, %cst_42 {dimension_numbers = #tpu.dot_dimension_numbers<[1], [0], [0], [1], [0, 0, 1, 1], [], []>} : vector<8x64xf32>, vector<64x256xf32>, vector<8x256xf32> -> vector<8x256xf32>
    %210 = vector.extract_strided_slice %209 {offsets = [0, 128], sizes = [8, 128], strides = [1, 1]} : vector<8x256xf32> to vector<8x128xf32>
    %211 = vector.extract_strided_slice %209 {offsets = [0, 0], sizes = [8, 128], strides = [1, 1]} : vector<8x256xf32> to vector<8x128xf32>
    %212 = vector.broadcast %3 : vector<1x128xf32> to vector<8x128xf32>
    %213 = arith.addf %211, %212 : vector<8x128xf32>
    %214 = arith.negf %213 : vector<8x128xf32>
    %215 = math.exp %214 : vector<8x128xf32>
    %cst_43 = arith.constant 1.000000e+00 : f32
    %216 = vector.broadcast %cst_43 : f32 to vector<8x128xf32>
    %217 = arith.addf %216, %215 : vector<8x128xf32>
    %218 = arith.divf %216, %217 : vector<8x128xf32>
    %219 = vector.extract_strided_slice %218 {offsets = [0, 64], sizes = [8, 32], strides = [1, 1]} : vector<8x128xf32> to vector<8x32xf32>
    %cst_44 = arith.constant 2.000000e+00 : f32
    %220 = vector.broadcast %cst_44 : f32 to vector<8x32xf32>
    %221 = arith.mulf %220, %219 : vector<8x32xf32>
    %cst_45 = arith.constant 1.000000e+00 : f32
    %222 = vector.broadcast %cst_45 : f32 to vector<8x32xf32>
    %223 = arith.subf %221, %222 : vector<8x32xf32>
    %224 = vector.extract_strided_slice %218 {offsets = [0, 32], sizes = [8, 32], strides = [1, 1]} : vector<8x128xf32> to vector<8x32xf32>
    %225 = arith.mulf %224, %184 : vector<8x32xf32>
    %226 = vector.extract_strided_slice %218 {offsets = [0, 0], sizes = [8, 32], strides = [1, 1]} : vector<8x128xf32> to vector<8x32xf32>
    %227 = arith.mulf %226, %223 : vector<8x32xf32>
    %228 = arith.addf %225, %227 : vector<8x32xf32>
    %229 = vector.extract_strided_slice %218 {offsets = [0, 96], sizes = [8, 32], strides = [1, 1]} : vector<8x128xf32> to vector<8x32xf32>
    %230 = math.tanh %228 : vector<8x32xf32>
    %231 = arith.mulf %229, %230 : vector<8x32xf32>
    %232 = vector.extract_strided_slice %7 {offsets = [40, 0], sizes = [8, 128], strides = [1, 1]} : vector<64x128xf32> to vector<8x128xf32>
    %233 = arith.addf %232, %210 : vector<8x128xf32>
    %234 = arith.negf %233 : vector<8x128xf32>
    %235 = math.exp %234 : vector<8x128xf32>
    %cst_46 = arith.constant 1.000000e+00 : f32
    %236 = vector.broadcast %cst_46 : f32 to vector<8x128xf32>
    %237 = arith.addf %236, %235 : vector<8x128xf32>
    %238 = arith.divf %236, %237 : vector<8x128xf32>
    %239 = vector.extract_strided_slice %238 {offsets = [0, 64], sizes = [8, 32], strides = [1, 1]} : vector<8x128xf32> to vector<8x32xf32>
    %cst_47 = arith.constant 2.000000e+00 : f32
    %240 = vector.broadcast %cst_47 : f32 to vector<8x32xf32>
    %241 = arith.mulf %240, %239 : vector<8x32xf32>
    %cst_48 = arith.constant 1.000000e+00 : f32
    %242 = vector.broadcast %cst_48 : f32 to vector<8x32xf32>
    %243 = arith.subf %241, %242 : vector<8x32xf32>
    %244 = vector.extract_strided_slice %238 {offsets = [0, 32], sizes = [8, 32], strides = [1, 1]} : vector<8x128xf32> to vector<8x32xf32>
    %245 = arith.mulf %244, %204 : vector<8x32xf32>
    %246 = vector.extract_strided_slice %238 {offsets = [0, 0], sizes = [8, 32], strides = [1, 1]} : vector<8x128xf32> to vector<8x32xf32>
    %247 = arith.mulf %246, %243 : vector<8x32xf32>
    %248 = arith.addf %245, %247 : vector<8x32xf32>
    %249 = vector.extract_strided_slice %238 {offsets = [0, 96], sizes = [8, 32], strides = [1, 1]} : vector<8x128xf32> to vector<8x32xf32>
    %250 = math.tanh %248 : vector<8x32xf32>
    %251 = arith.mulf %249, %250 : vector<8x32xf32>
    %252 = tpu.concatenate %251, %231 in 1 : vector<8x32xf32>, vector<8x32xf32> -> vector<8x64xf32>
    %cst_49 = arith.constant dense<0.000000e+00> : vector<8x256xf32>
    %253 = tpu.matmul %252, %1, %cst_49 {dimension_numbers = #tpu.dot_dimension_numbers<[1], [0], [0], [1], [0, 0, 1, 1], [], []>} : vector<8x64xf32>, vector<64x256xf32>, vector<8x256xf32> -> vector<8x256xf32>
    %254 = vector.extract_strided_slice %253 {offsets = [0, 128], sizes = [8, 128], strides = [1, 1]} : vector<8x256xf32> to vector<8x128xf32>
    %255 = vector.extract_strided_slice %253 {offsets = [0, 0], sizes = [8, 128], strides = [1, 1]} : vector<8x256xf32> to vector<8x128xf32>
    %256 = vector.broadcast %3 : vector<1x128xf32> to vector<8x128xf32>
    %257 = arith.addf %255, %256 : vector<8x128xf32>
    %258 = arith.negf %257 : vector<8x128xf32>
    %259 = math.exp %258 : vector<8x128xf32>
    %cst_50 = arith.constant 1.000000e+00 : f32
    %260 = vector.broadcast %cst_50 : f32 to vector<8x128xf32>
    %261 = arith.addf %260, %259 : vector<8x128xf32>
    %262 = arith.divf %260, %261 : vector<8x128xf32>
    %263 = vector.extract_strided_slice %262 {offsets = [0, 64], sizes = [8, 32], strides = [1, 1]} : vector<8x128xf32> to vector<8x32xf32>
    %cst_51 = arith.constant 2.000000e+00 : f32
    %264 = vector.broadcast %cst_51 : f32 to vector<8x32xf32>
    %265 = arith.mulf %264, %263 : vector<8x32xf32>
    %cst_52 = arith.constant 1.000000e+00 : f32
    %266 = vector.broadcast %cst_52 : f32 to vector<8x32xf32>
    %267 = arith.subf %265, %266 : vector<8x32xf32>
    %268 = vector.extract_strided_slice %262 {offsets = [0, 32], sizes = [8, 32], strides = [1, 1]} : vector<8x128xf32> to vector<8x32xf32>
    %269 = arith.mulf %268, %228 : vector<8x32xf32>
    %270 = vector.extract_strided_slice %262 {offsets = [0, 0], sizes = [8, 32], strides = [1, 1]} : vector<8x128xf32> to vector<8x32xf32>
    %271 = arith.mulf %270, %267 : vector<8x32xf32>
    %272 = arith.addf %269, %271 : vector<8x32xf32>
    %273 = vector.extract_strided_slice %262 {offsets = [0, 96], sizes = [8, 32], strides = [1, 1]} : vector<8x128xf32> to vector<8x32xf32>
    %274 = math.tanh %272 : vector<8x32xf32>
    %275 = arith.mulf %273, %274 : vector<8x32xf32>
    %276 = vector.extract_strided_slice %7 {offsets = [48, 0], sizes = [8, 128], strides = [1, 1]} : vector<64x128xf32> to vector<8x128xf32>
    %277 = arith.addf %276, %254 : vector<8x128xf32>
    %278 = arith.negf %277 : vector<8x128xf32>
    %279 = math.exp %278 : vector<8x128xf32>
    %cst_53 = arith.constant 1.000000e+00 : f32
    %280 = vector.broadcast %cst_53 : f32 to vector<8x128xf32>
    %281 = arith.addf %280, %279 : vector<8x128xf32>
    %282 = arith.divf %280, %281 : vector<8x128xf32>
    %283 = vector.extract_strided_slice %282 {offsets = [0, 64], sizes = [8, 32], strides = [1, 1]} : vector<8x128xf32> to vector<8x32xf32>
    %cst_54 = arith.constant 2.000000e+00 : f32
    %284 = vector.broadcast %cst_54 : f32 to vector<8x32xf32>
    %285 = arith.mulf %284, %283 : vector<8x32xf32>
    %cst_55 = arith.constant 1.000000e+00 : f32
    %286 = vector.broadcast %cst_55 : f32 to vector<8x32xf32>
    %287 = arith.subf %285, %286 : vector<8x32xf32>
    %288 = vector.extract_strided_slice %282 {offsets = [0, 32], sizes = [8, 32], strides = [1, 1]} : vector<8x128xf32> to vector<8x32xf32>
    %289 = arith.mulf %288, %248 : vector<8x32xf32>
    %290 = vector.extract_strided_slice %282 {offsets = [0, 0], sizes = [8, 32], strides = [1, 1]} : vector<8x128xf32> to vector<8x32xf32>
    %291 = arith.mulf %290, %287 : vector<8x32xf32>
    %292 = arith.addf %289, %291 : vector<8x32xf32>
    %293 = vector.extract_strided_slice %282 {offsets = [0, 96], sizes = [8, 32], strides = [1, 1]} : vector<8x128xf32> to vector<8x32xf32>
    %294 = math.tanh %292 : vector<8x32xf32>
    %295 = arith.mulf %293, %294 : vector<8x32xf32>
    %296 = tpu.concatenate %295, %275 in 1 : vector<8x32xf32>, vector<8x32xf32> -> vector<8x64xf32>
    %cst_56 = arith.constant dense<0.000000e+00> : vector<8x256xf32>
    %297 = tpu.matmul %296, %1, %cst_56 {dimension_numbers = #tpu.dot_dimension_numbers<[1], [0], [0], [1], [0, 0, 1, 1], [], []>} : vector<8x64xf32>, vector<64x256xf32>, vector<8x256xf32> -> vector<8x256xf32>
    %298 = vector.extract_strided_slice %297 {offsets = [0, 128], sizes = [8, 128], strides = [1, 1]} : vector<8x256xf32> to vector<8x128xf32>
    %299 = vector.extract_strided_slice %297 {offsets = [0, 0], sizes = [8, 128], strides = [1, 1]} : vector<8x256xf32> to vector<8x128xf32>
    %300 = vector.broadcast %3 : vector<1x128xf32> to vector<8x128xf32>
    %301 = arith.addf %299, %300 : vector<8x128xf32>
    %302 = arith.negf %301 : vector<8x128xf32>
    %303 = math.exp %302 : vector<8x128xf32>
    %cst_57 = arith.constant 1.000000e+00 : f32
    %304 = vector.broadcast %cst_57 : f32 to vector<8x128xf32>
    %305 = arith.addf %304, %303 : vector<8x128xf32>
    %306 = arith.divf %304, %305 : vector<8x128xf32>
    %307 = vector.extract_strided_slice %306 {offsets = [0, 64], sizes = [8, 32], strides = [1, 1]} : vector<8x128xf32> to vector<8x32xf32>
    %cst_58 = arith.constant 2.000000e+00 : f32
    %308 = vector.broadcast %cst_58 : f32 to vector<8x32xf32>
    %309 = arith.mulf %308, %307 : vector<8x32xf32>
    %cst_59 = arith.constant 1.000000e+00 : f32
    %310 = vector.broadcast %cst_59 : f32 to vector<8x32xf32>
    %311 = arith.subf %309, %310 : vector<8x32xf32>
    %312 = vector.extract_strided_slice %306 {offsets = [0, 32], sizes = [8, 32], strides = [1, 1]} : vector<8x128xf32> to vector<8x32xf32>
    %313 = arith.mulf %312, %272 : vector<8x32xf32>
    %314 = vector.extract_strided_slice %306 {offsets = [0, 0], sizes = [8, 32], strides = [1, 1]} : vector<8x128xf32> to vector<8x32xf32>
    %315 = arith.mulf %314, %311 : vector<8x32xf32>
    %316 = arith.addf %313, %315 : vector<8x32xf32>
    %317 = vector.extract_strided_slice %306 {offsets = [0, 96], sizes = [8, 32], strides = [1, 1]} : vector<8x128xf32> to vector<8x32xf32>
    %318 = math.tanh %316 : vector<8x32xf32>
    %319 = arith.mulf %317, %318 : vector<8x32xf32>
    %320 = vector.extract_strided_slice %7 {offsets = [56, 0], sizes = [8, 128], strides = [1, 1]} : vector<64x128xf32> to vector<8x128xf32>
    %321 = arith.addf %320, %298 : vector<8x128xf32>
    %322 = arith.negf %321 : vector<8x128xf32>
    %323 = math.exp %322 : vector<8x128xf32>
    %cst_60 = arith.constant 1.000000e+00 : f32
    %324 = vector.broadcast %cst_60 : f32 to vector<8x128xf32>
    %325 = arith.addf %324, %323 : vector<8x128xf32>
    %326 = arith.divf %324, %325 : vector<8x128xf32>
    %327 = vector.extract_strided_slice %326 {offsets = [0, 64], sizes = [8, 32], strides = [1, 1]} : vector<8x128xf32> to vector<8x32xf32>
    %cst_61 = arith.constant 2.000000e+00 : f32
    %328 = vector.broadcast %cst_61 : f32 to vector<8x32xf32>
    %329 = arith.mulf %328, %327 : vector<8x32xf32>
    %cst_62 = arith.constant 1.000000e+00 : f32
    %330 = vector.broadcast %cst_62 : f32 to vector<8x32xf32>
    %331 = arith.subf %329, %330 : vector<8x32xf32>
    %332 = vector.extract_strided_slice %326 {offsets = [0, 32], sizes = [8, 32], strides = [1, 1]} : vector<8x128xf32> to vector<8x32xf32>
    %333 = arith.mulf %332, %292 : vector<8x32xf32>
    %334 = vector.extract_strided_slice %326 {offsets = [0, 0], sizes = [8, 32], strides = [1, 1]} : vector<8x128xf32> to vector<8x32xf32>
    %335 = arith.mulf %334, %331 : vector<8x32xf32>
    %336 = arith.addf %333, %335 : vector<8x32xf32>
    %337 = vector.extract_strided_slice %326 {offsets = [0, 96], sizes = [8, 32], strides = [1, 1]} : vector<8x128xf32> to vector<8x32xf32>
    %338 = math.tanh %336 : vector<8x32xf32>
    %339 = arith.mulf %337, %338 : vector<8x32xf32>
    %340 = tpu.concatenate %339, %319 in 1 : vector<8x32xf32>, vector<8x32xf32> -> vector<8x64xf32>
    %cst_63 = arith.constant dense<0.000000e+00> : vector<8x256xf32>
    %341 = tpu.matmul %340, %1, %cst_63 {dimension_numbers = #tpu.dot_dimension_numbers<[1], [0], [0], [1], [0, 0, 1, 1], [], []>} : vector<8x64xf32>, vector<64x256xf32>, vector<8x256xf32> -> vector<8x256xf32>
    %342 = vector.extract_strided_slice %341 {offsets = [0, 0], sizes = [8, 128], strides = [1, 1]} : vector<8x256xf32> to vector<8x128xf32>
    %343 = vector.broadcast %3 : vector<1x128xf32> to vector<8x128xf32>
    %344 = arith.addf %342, %343 : vector<8x128xf32>
    %345 = arith.negf %344 : vector<8x128xf32>
    %346 = math.exp %345 : vector<8x128xf32>
    %cst_64 = arith.constant 1.000000e+00 : f32
    %347 = vector.broadcast %cst_64 : f32 to vector<8x128xf32>
    %348 = arith.addf %347, %346 : vector<8x128xf32>
    %349 = arith.divf %347, %348 : vector<8x128xf32>
    %350 = vector.extract_strided_slice %349 {offsets = [0, 64], sizes = [8, 32], strides = [1, 1]} : vector<8x128xf32> to vector<8x32xf32>
    %cst_65 = arith.constant 2.000000e+00 : f32
    %351 = vector.broadcast %cst_65 : f32 to vector<8x32xf32>
    %352 = arith.mulf %351, %350 : vector<8x32xf32>
    %cst_66 = arith.constant 1.000000e+00 : f32
    %353 = vector.broadcast %cst_66 : f32 to vector<8x32xf32>
    %354 = arith.subf %352, %353 : vector<8x32xf32>
    %355 = vector.extract_strided_slice %349 {offsets = [0, 32], sizes = [8, 32], strides = [1, 1]} : vector<8x128xf32> to vector<8x32xf32>
    %356 = arith.mulf %355, %316 : vector<8x32xf32>
    %357 = vector.extract_strided_slice %349 {offsets = [0, 0], sizes = [8, 32], strides = [1, 1]} : vector<8x128xf32> to vector<8x32xf32>
    %358 = arith.mulf %357, %354 : vector<8x32xf32>
    %359 = arith.addf %356, %358 : vector<8x32xf32>
    %360 = vector.extract_strided_slice %349 {offsets = [0, 96], sizes = [8, 32], strides = [1, 1]} : vector<8x128xf32> to vector<8x32xf32>
    %361 = math.tanh %359 : vector<8x32xf32>
    %362 = arith.mulf %360, %361 : vector<8x32xf32>
    %363 = tpu.concatenate %55, %99, %143, %187, %231, %275, %319, %362 in 1 : vector<8x32xf32>, vector<8x32xf32>, vector<8x32xf32>, vector<8x32xf32>, vector<8x32xf32>, vector<8x32xf32>, vector<8x32xf32>, vector<8x32xf32> -> vector<8x256xf32>
    %c0_67 = arith.constant 0 : index
    %c0_68 = arith.constant 0 : index
    %364 = vector.load %arg2[%c0_67, %c0_68] : memref<392x128xf32, #tpu.memory_space<vmem>>, vector<256x128xf32>
    %c256 = arith.constant 256 : index
    %c0_69 = arith.constant 0 : index
    %365 = vector.load %arg2[%c256, %c0_69] : memref<392x128xf32, #tpu.memory_space<vmem>>, vector<128x8xf32>
    %c384 = arith.constant 384 : index
    %c0_70 = arith.constant 0 : index
    %366 = vector.load %arg2[%c384, %c0_70] : memref<392x128xf32, #tpu.memory_space<vmem>>, vector<1x128xf32>
    %cst_71 = arith.constant dense<0.000000e+00> : vector<8x128xf32>
    %367 = tpu.matmul %363, %364, %cst_71 {dimension_numbers = #tpu.dot_dimension_numbers<[1], [0], [0], [1], [0, 0, 1, 1], [], []>} : vector<8x256xf32>, vector<256x128xf32>, vector<8x128xf32> -> vector<8x128xf32>
    %368 = vector.broadcast %366 : vector<1x128xf32> to vector<8x128xf32>
    %369 = arith.addf %367, %368 : vector<8x128xf32>
    %cst_72 = arith.constant 0.000000e+00 : f32
    %370 = vector.broadcast %cst_72 : f32 to vector<8x128xf32>
    %371 = arith.maximumf %369, %370 : vector<8x128xf32>
    %cst_73 = arith.constant dense<0.000000e+00> : vector<8x8xf32>
    %372 = tpu.matmul %371, %365, %cst_73 {dimension_numbers = #tpu.dot_dimension_numbers<[1], [0], [0], [1], [0, 0, 1, 1], [], []>} : vector<8x128xf32>, vector<128x8xf32>, vector<8x8xf32> -> vector<8x8xf32>
    %cst_74 = arith.constant dense<0xFF800000> : vector<8xf32>
    %373 = vector.multi_reduction <maximumf>, %372, %cst_74 [1] : vector<8x8xf32> to vector<8xf32>
    %374 = vector.shape_cast %373 : vector<8xf32> to vector<8x1xf32>
    %375 = vector.broadcast %374 : vector<8x1xf32> to vector<8x8xf32>
    %376 = arith.subf %372, %375 : vector<8x8xf32>
    %377 = math.exp %376 : vector<8x8xf32>
    %cst_75 = arith.constant dense<0.000000e+00> : vector<8xf32>
    %378 = vector.multi_reduction <add>, %377, %cst_75 [1] : vector<8x8xf32> to vector<8xf32>
    %379 = vector.shape_cast %378 : vector<8xf32> to vector<8x1xf32>
    %380 = vector.broadcast %379 : vector<8x1xf32> to vector<8x8xf32>
    %381 = arith.divf %377, %380 : vector<8x8xf32>
    %c0_76 = arith.constant 0 : index
    %c0_77 = arith.constant 0 : index
    %382 = vector.load %arg5[%c0_76, %c0_77] : memref<8x8xf32, #tpu.memory_space<vmem>>, vector<8x8xf32>
    tpu.vector_store %arg5[%c0_76, %c0_77], %381 {strides = array<i32>} : memref<8x8xf32, #tpu.memory_space<vmem>>, vector<8x8xf32>,
    %383 = vector.extract_strided_slice %381 {offsets = [0, 0], sizes = [8, 1], strides = [1, 1]} : vector<8x8xf32> to vector<8x1xf32>
    %384 = vector.broadcast %383 : vector<8x1xf32> to vector<8x32xf32>
    %385 = arith.mulf %55, %384 : vector<8x32xf32>
    %386 = vector.extract_strided_slice %381 {offsets = [0, 1], sizes = [8, 1], strides = [1, 1]} : vector<8x8xf32> to vector<8x1xf32>
    %387 = vector.broadcast %386 : vector<8x1xf32> to vector<8x32xf32>
    %388 = arith.mulf %99, %387 : vector<8x32xf32>
    %389 = arith.addf %385, %388 : vector<8x32xf32>
    %390 = vector.extract_strided_slice %381 {offsets = [0, 2], sizes = [8, 1], strides = [1, 1]} : vector<8x8xf32> to vector<8x1xf32>
    %391 = vector.broadcast %390 : vector<8x1xf32> to vector<8x32xf32>
    %392 = arith.mulf %143, %391 : vector<8x32xf32>
    %393 = arith.addf %389, %392 : vector<8x32xf32>
    %394 = vector.extract_strided_slice %381 {offsets = [0, 3], sizes = [8, 1], strides = [1, 1]} : vector<8x8xf32> to vector<8x1xf32>
    %395 = vector.broadcast %394 : vector<8x1xf32> to vector<8x32xf32>
    %396 = arith.mulf %187, %395 : vector<8x32xf32>
    %397 = arith.addf %393, %396 : vector<8x32xf32>
    %398 = vector.extract_strided_slice %381 {offsets = [0, 4], sizes = [8, 1], strides = [1, 1]} : vector<8x8xf32> to vector<8x1xf32>
    %399 = vector.broadcast %398 : vector<8x1xf32> to vector<8x32xf32>
    %400 = arith.mulf %231, %399 : vector<8x32xf32>
    %401 = arith.addf %397, %400 : vector<8x32xf32>
    %402 = vector.extract_strided_slice %381 {offsets = [0, 5], sizes = [8, 1], strides = [1, 1]} : vector<8x8xf32> to vector<8x1xf32>
    %403 = vector.broadcast %402 : vector<8x1xf32> to vector<8x32xf32>
    %404 = arith.mulf %275, %403 : vector<8x32xf32>
    %405 = arith.addf %401, %404 : vector<8x32xf32>
    %406 = vector.extract_strided_slice %381 {offsets = [0, 6], sizes = [8, 1], strides = [1, 1]} : vector<8x8xf32> to vector<8x1xf32>
    %407 = vector.broadcast %406 : vector<8x1xf32> to vector<8x32xf32>
    %408 = arith.mulf %319, %407 : vector<8x32xf32>
    %409 = arith.addf %405, %408 : vector<8x32xf32>
    %410 = vector.extract_strided_slice %381 {offsets = [0, 7], sizes = [8, 1], strides = [1, 1]} : vector<8x8xf32> to vector<8x1xf32>
    %411 = vector.broadcast %410 : vector<8x1xf32> to vector<8x32xf32>
    %412 = arith.mulf %362, %411 : vector<8x32xf32>
    %413 = arith.addf %409, %412 : vector<8x32xf32>
    %c8 = arith.constant 8 : index
    %c0_78 = arith.constant 0 : index
    %414 = vector.load %arg3[%c8, %c0_78] : memref<40x128xf32, #tpu.memory_space<vmem>>, vector<32x32xf32>
    %c8_79 = arith.constant 8 : index
    %c32 = arith.constant 32 : index
    %415 = vector.load %arg3[%c8_79, %c32] : memref<40x128xf32, #tpu.memory_space<vmem>>, vector<32x2xf32>
    %c2 = arith.constant 2 : index
    %c0_80 = arith.constant 0 : index
    %416 = vector.load %arg3[%c2, %c0_80] : memref<40x128xf32, #tpu.memory_space<vmem>>, vector<1x32xf32>
    %c2_81 = arith.constant 2 : index
    %c32_82 = arith.constant 32 : index
    %417 = vector.load %arg3[%c2_81, %c32_82] : memref<40x128xf32, #tpu.memory_space<vmem>>, vector<1x2xf32>
    %cst_83 = arith.constant dense<0.000000e+00> : vector<8x32xf32>
    %418 = tpu.matmul %413, %414, %cst_83 {dimension_numbers = #tpu.dot_dimension_numbers<[1], [0], [0], [1], [0, 0, 1, 1], [], []>} : vector<8x32xf32>, vector<32x32xf32>, vector<8x32xf32> -> vector<8x32xf32>
    %419 = vector.broadcast %416 : vector<1x32xf32> to vector<8x32xf32>
    %420 = arith.addf %418, %419 : vector<8x32xf32>
    %cst_84 = arith.constant 0.000000e+00 : f32
    %421 = vector.broadcast %cst_84 : f32 to vector<8x32xf32>
    %422 = arith.maximumf %420, %421 : vector<8x32xf32>
    %cst_85 = arith.constant dense<0.000000e+00> : vector<8x2xf32>
    %423 = tpu.matmul %422, %415, %cst_85 {dimension_numbers = #tpu.dot_dimension_numbers<[1], [0], [0], [1], [0, 0, 1, 1], [], []>} : vector<8x32xf32>, vector<32x2xf32>, vector<8x2xf32> -> vector<8x2xf32>
    %424 = vector.broadcast %417 : vector<1x2xf32> to vector<8x2xf32>
    %425 = arith.addf %423, %424 : vector<8x2xf32>
    %c0_86 = arith.constant 0 : index
    %c0_87 = arith.constant 0 : index
    %426 = vector.load %arg4[%c0_86, %c0_87] : memref<8x2xf32, #tpu.memory_space<vmem>>, vector<8x2xf32>
    tpu.vector_store %arg4[%c0_86, %c0_87], %425 {strides = array<i32>} : memref<8x2xf32, #tpu.memory_space<vmem>>, vector<8x2xf32>,
    return
  }
}

</mosaic_0001>

<llo_original>
// kernel: custom_net_forward.1
$region0: #{custom_net_forward.1}
  #allocation0 [shape = 'u32[]', space=smem, size = 0x4, offset = 0x4, fixed_abs, tag = 'smem constant byte address 0x4 - core index']
  #allocation1 [shape = 'u32[144,128]{1,0:T(1,128)}', space=vmem, size = 0x12000, scoped, tag = 'internal scratch']
  %s0 = inlined_call_operand.vmem [shape: f32[64,16], index: 0, kind: input, shape index: {}]
  %s1 = inlined_call_operand.vmem [shape: f32[80,256], index: 1, kind: input, shape index: {}]
  %s2 = inlined_call_operand.vmem [shape: f32[392,128], index: 2, kind: input, shape index: {}]
  %s3 = inlined_call_operand.vmem [shape: f32[40,128], index: 3, kind: input, shape index: {}]
  %s4 = inlined_call_operand.vmem [shape: f32[8,2], index: 4, kind: output, shape index: {0}]
  %s5 = inlined_call_operand.vmem [shape: f32[8,8], index: 5, kind: output, shape index: {1}]
  %6 = xla_tuple %s4, %s5
  %s7 = sld [smem:[#allocation0]]
  $region34: #{custom_net_forward.1} parent=0
    _
  %s9 = ssub.s32 1, %s7
  %s10 = scalar_select 0, %s9, %s7
  // Predicated region
  $region2: #{custom_net_forward.1} parent=0 // pred_check
    _
  $region3: #{custom_net_forward.1} parent=0 // pred_check_branch
    %12 = sbr.rel (0) target = $region5
  $region4: #{custom_net_forward.1} parent=0 // pred_region
    _
  $region5: #{custom_net_forward.1} parent=0 // pred_fallthru
    _
  // Predicated region
  $region6: #{custom_net_forward.1} parent=0 // pred_check
    _
  $region7: #{custom_net_forward.1} parent=0 // pred_check_branch
    %14 = sbr.rel (0) target = $region9
  $region8: #{custom_net_forward.1} parent=0 // pred_region
    _
  $region9: #{custom_net_forward.1} parent=0 // pred_fallthru
    _
  // Predicated region
  $region10: #{custom_net_forward.1} parent=0 // pred_check
    _
  $region11: #{custom_net_forward.1} parent=0 // pred_check_branch
    %16 = sbr.rel (0) target = $region13
  $region12: #{custom_net_forward.1} parent=0 // pred_region
    _
  $region13: #{custom_net_forward.1} parent=0 // pred_fallthru
    _
  // Predicated region
  $region14: #{custom_net_forward.1} parent=0 // pred_check
    _
  $region15: #{custom_net_forward.1} parent=0 // pred_check_branch
    %18 = sbr.rel (0) target = $region17
  $region16: #{custom_net_forward.1} parent=0 // pred_region
    _
  $region17: #{custom_net_forward.1} parent=0 // pred_fallthru
    _
  %v19 = vld [vmem:[%s1] sm:$0xff]
  %v20 = vld [vmem:[%s1 + $0x10] sm:$0xff]
  %v21 = vld [vmem:[%s1 + $0x20] sm:$0xff]
  %v22 = vld [vmem:[%s1 + $0x28] sm:$0xff]
  %v23 = vld [vmem:[%s1 + $0x30] sm:$0xff]
  %v24 = vld [vmem:[%s1 + $0x38] sm:$0xff]
  %v25 = vld [vmem:[%s1 + $0x40] sm:$0xff]
  %v26 = vld [vmem:[%s1 + $0x48] sm:$0xff]
  %v27 = vld [vmem:[%s1 + $0x50] sm:$0xff]
  %v28 = vld [vmem:[%s1 + $0x58] sm:$0xff]
  %v29 = vld [vmem:[%s1 + $0x60] sm:$0xff]
  %v30 = vld [vmem:[%s1 + $0x68] sm:$0xff]
  %v31 = vld [vmem:[%s1 + $0x70] sm:$0xff]
  %v32 = vld [vmem:[%s1 + $0x78] sm:$0xff]
  %v33 = vld [vmem:[%s1 + $0x80] sm:$0xff]
  %v34 = vld [vmem:[%s1 + $0x88] sm:$0xff]
  %v35 = vld [vmem:[%s1 + $0x90] sm:$0xff]
  %v36 = vld [vmem:[%s1 + $0x98] sm:$0xff]
  %v37 = vld [vmem:[%s3] sm:$0x1]
  %v38 = vld [vmem:[%s3 + $0x1] sm:$0x1]
  %v39 = vld [vmem:[%s0] sm:$0xff]
  %v40 = vld [vmem:[%s0 + $0x8] sm:$0xff]
  %v41 = vld [vmem:[%s0 + $0x10] sm:$0xff]
  %v42 = vld [vmem:[%s0 + $0x18] sm:$0xff]
  %v43 = vld [vmem:[%s0 + $0x20] sm:$0xff]
  %v44 = vld [vmem:[%s0 + $0x28] sm:$0xff]
  %v45 = vld [vmem:[%s0 + $0x30] sm:$0xff]
  %v46 = vld [vmem:[%s0 + $0x38] sm:$0xff]
  %v47 = vlaneseq
  %v48 = vshrl.u32 %v47, 7
  %v49 = vsub.s32 0, %v48
  %v50 = vrot.slane %v37, %v49
  %vm51 = vcmask 130048
  %v53 = vsel %vm51, %v39, 0
  %v56 = vsel %vm51, %v40, 0
  %v59 = vsel %vm51, %v41, 0
  %v62 = vsel %vm51, %v42, 0
  %v65 = vsel %vm51, %v43, 0
  %v68 = vsel %vm51, %v44, 0
  %v71 = vsel %vm51, %v45, 0
  %v74 = vsel %vm51, %v46, 0
  %76 = vmatprep.subr.mxu0 0.0
  %77 = vmatpush1.msra.mxu0 %v19
  %78 = vmatprep.subr.mxu0 0.0
  %79 = vmatpush1.msra.mxu0 %v20
  %80 = vmatprep.subr.mxu0 0.0
  %81 = vmatpush1.msra.mxu0 0.0
  %82 = vmatprep.subr.mxu0 0.0
  %83 = vmatpush1.msra.mxu0 0.0
  %84 = vmatprep.subr.mxu0 0.0
  %85 = vmatpush1.msra.mxu0 0.0
  %86 = vmatprep.subr.mxu0 0.0
  %87 = vmatpush1.msra.mxu0 0.0
  %88 = vmatprep.subr.mxu0 0.0
  %89 = vmatpush1.msra.mxu0 0.0
  %90 = vmatprep.subr.mxu0 0.0
  %91 = vmatpush1.msra.mxu0 0.0
  %92 = vmatprep.subr.mxu0 0.0
  %93 = vmatpush1.msra.mxu0 0.0
  %94 = vmatprep.subr.mxu0 0.0
  %95 = vmatpush1.msra.mxu0 0.0
  %96 = vmatprep.subr.mxu0 0.0
  %97 = vmatpush1.msra.mxu0 0.0
  %98 = vmatprep.subr.mxu0 0.0
  %99 = vmatpush1.msra.mxu0 0.0
  %100 = vmatprep.subr.mxu0 0.0
  %101 = vmatpush1.msra.mxu0 0.0
  %102 = vmatprep.subr.mxu0 0.0
  %103 = vmatpush1.msra.mxu0 0.0
  %104 = vmatprep.subr.mxu0 0.0
  %105 = vmatpush1.msra.mxu0 0.0
  %106 = vmatprep.subr.mxu0 0.0
  %107 = vmatpush1.msra.mxu0 0.0
  %108 = vmatprep.subr.mxu0 0.0
  %109 = vmatpush1.msra.mxu0 0.0
  %110 = vmatprep.subr.mxu0 0.0
  %111 = vmatpush1.msra.mxu0 0.0
  %112 = vmatprep.subr.mxu0 0.0
  %113 = vmatpush1.msra.mxu0 0.0
  %114 = vmatprep.subr.mxu0 0.0
  %115 = vmatpush1.msra.mxu0 0.0
  %116 = vmatprep.subr.mxu0 0.0
  %117 = vmatpush1.msra.mxu0 0.0
  %118 = vmatprep.subr.mxu0 0.0
  %119 = vmatpush1.msra.mxu0 0.0
  %120 = vmatprep.subr.mxu0 0.0
  %121 = vmatpush1.msra.mxu0 0.0
  %122 = vmatprep.subr.mxu0 0.0
  %123 = vmatpush1.msra.mxu0 0.0
  %124 = vmatprep.subr.mxu0 0.0
  %125 = vmatpush1.msra.mxu0 0.0
  %126 = vmatprep.subr.mxu0 0.0
  %127 = vmatpush1.msra.mxu0 0.0
  %128 = vmatprep.subr.mxu0 0.0
  %129 = vmatpush1.msra.mxu0 0.0
  %130 = vmatprep.subr.mxu0 0.0
  %131 = vmatpush1.msra.mxu0 0.0
  %132 = vmatprep.subr.mxu0 0.0
  %133 = vmatpush1.msra.mxu0 0.0
  %134 = vmatprep.subr.mxu0 0.0
  %135 = vmatpush1.msra.mxu0 0.0
  %136 = vmatprep.subr.mxu0 0.0
  %137 = vmatpush1.msra.mxu0 0.0
  %138 = vmatprep.subr.mxu0 0.0
  %139 = vmatpush1.msra.mxu0 0.0
  %140 = vmatprep.mubr.f32.mxu0 0.0
  %141 = vmatmul.mubr.f32.gmra.mrb[0].mxu0 %v53
  %v142 = vpop.f32.mrb[0].mxu0
  %v143 = vadd.f32 %v50, %v142
  %v144 = vpop.f32.mrb[0].mxu0
  %145 = vmatprep.mubr.f32.mxu0 0.0
  %146 = vmatmul.mubr.f32.gmra.mrb[0].mxu0 %v56
  %v147 = vpop.f32.mrb[0].mxu0
  %v148 = vadd.f32 %v50, %v147
  %v149 = vpop.f32.mrb[0].mxu0
  %150 = vmatprep.mubr.f32.mxu0 0.0
  %151 = vmatmul.mubr.f32.gmra.mrb[0].mxu0 %v59
  %v152 = vpop.f32.mrb[0].mxu0
  %v153 = vadd.f32 %v50, %v152
  %v154 = vpop.f32.mrb[0].mxu0
  %155 = vmatprep.mubr.f32.mxu0 0.0
  %156 = vmatmul.mubr.f32.gmra.mrb[0].mxu0 %v62
  %v157 = vpop.f32.mrb[0].mxu0
  %v158 = vadd.f32 %v50, %v157
  %v159 = vpop.f32.mrb[0].mxu0
  %160 = vmatprep.mubr.f32.mxu0 0.0
  %161 = vmatmul.mubr.f32.gmra.mrb[0].mxu0 %v65
  %v162 = vpop.f32.mrb[0].mxu0
  %v163 = vadd.f32 %v50, %v162
  %v164 = vpop.f32.mrb[0].mxu0
  %165 = vmatprep.mubr.f32.mxu0 0.0
  %166 = vmatmul.mubr.f32.gmra.mrb[0].mxu0 %v68
  %v167 = vpop.f32.mrb[0].mxu0
  %v168 = vadd.f32 %v50, %v167
  %v169 = vpop.f32.mrb[0].mxu0
  %170 = vmatprep.mubr.f32.mxu0 0.0
  %171 = vmatmul.mubr.f32.gmra.mrb[0].mxu0 %v71
  %v172 = vpop.f32.mrb[0].mxu0
  %v173 = vadd.f32 %v50, %v172
  %v174 = vpop.f32.mrb[0].mxu0
  %175 = vmatprep.mubr.f32.mxu0 0.0
  %176 = vmatmul.mubr.f32.gmra.mrb[0].mxu0 %v74
  %v177 = vpop.f32.mrb[0].mxu0
  %v178 = vadd.f32 %v50, %v177
  %v179 = vpop.f32.mrb[0].mxu0
  %180 = vdwg.mxu0
  %v181 = vadd.f32 %v143, 0.0
  %v182 = vxor.u32 %v181, 2147483648
  %v183 = vmul.f32 %v182, 1.442695
  %v184 = vpow.pop %v183
  %v185 = vadd.f32 %v184, 1.0
  %v186 = vrcp.pop %v185
  %v187 = vmul.f32 1.0, %v186
  %v188 = vmul.f32 %v187, 2.0
  %v189 = vsub.f32 %v188, 1.0
  %v190 = vmul.f32 %v187, 0.0
  %192 = vrot.lane.b32.xlu0 %v189, 64
  %v193 = vpop.permute.xlu0 %192
  %v195 = vmul.f32 %v187, %v193
  %197 = vrot.lane.b32.xlu0 %v195, 32
  %v198 = vpop.permute.xlu0 %197
  %v200 = vadd.f32 %v190, %v198
  %v201 = vtanh.pop %v200
  %203 = vrot.lane.b32.xlu0 %v201, 64
  %v204 = vpop.permute.xlu0 %203
  %v206 = vmul.f32 %v187, %v204
  %208 = vrot.lane.b32.xlu0 %v206, 32
  %v209 = vpop.permute.xlu0 %208
  %vm211 = vcmask 261120
  %v212 = vsel %vm211, %v209, 0.0
  %vm213 = vcmask 523264
  %v215 = vsel %vm213, %v212, 0
  %217 = vmatprep.subr.mxu0 %v22
  %218 = vmatpush1.msra.mxu0 %v21
  %219 = vmatprep.subr.mxu0 %v24
  %220 = vmatpush1.msra.mxu0 %v23
  %221 = vmatprep.subr.mxu0 %v26
  %222 = vmatpush1.msra.mxu0 %v25
  %223 = vmatprep.subr.mxu0 %v28
  %224 = vmatpush1.msra.mxu0 %v27
  %225 = vmatprep.subr.mxu0 %v30
  %226 = vmatpush1.msra.mxu0 %v29
  %227 = vmatprep.subr.mxu0 %v32
  %228 = vmatpush1.msra.mxu0 %v31
  %229 = vmatprep.subr.mxu0 %v34
  %230 = vmatpush1.msra.mxu0 %v33
  %231 = vmatprep.subr.mxu0 %v36
  %232 = vmatpush1.msra.mxu0 %v35
  %233 = vmatprep.subr.mxu0 0.0
  %234 = vmatpush1.msra.mxu0 0.0
  %235 = vmatprep.subr.mxu0 0.0
  %236 = vmatpush1.msra.mxu0 0.0
  %237 = vmatprep.subr.mxu0 0.0
  %238 = vmatpush1.msra.mxu0 0.0
  %239 = vmatprep.subr.mxu0 0.0
  %240 = vmatpush1.msra.mxu0 0.0
  %241 = vmatprep.subr.mxu0 0.0
  %242 = vmatpush1.msra.mxu0 0.0
  %243 = vmatprep.subr.mxu0 0.0
  %244 = vmatpush1.msra.mxu0 0.0
  %245 = vmatprep.subr.mxu0 0.0
  %246 = vmatpush1.msra.mxu0 0.0
  %247 = vmatprep.subr.mxu0 0.0
  %248 = vmatpush1.msra.mxu0 0.0
  %249 = vmatprep.subr.mxu0 0.0
  %250 = vmatpush1.msra.mxu0 0.0
  %251 = vmatprep.subr.mxu0 0.0
  %252 = vmatpush1.msra.mxu0 0.0
  %253 = vmatprep.subr.mxu0 0.0
  %254 = vmatpush1.msra.mxu0 0.0
  %255 = vmatprep.subr.mxu0 0.0
  %256 = vmatpush1.msra.mxu0 0.0
  %257 = vmatprep.subr.mxu0 0.0
  %258 = vmatpush1.msra.mxu0 0.0
  %259 = vmatprep.subr.mxu0 0.0
  %260 = vmatpush1.msra.mxu0 0.0
  %261 = vmatprep.subr.mxu0 0.0
  %262 = vmatpush1.msra.mxu0 0.0
  %263 = vmatprep.subr.mxu0 0.0
  %264 = vmatpush1.msra.mxu0 0.0
  %265 = vmatprep.subr.mxu0 0.0
  %266 = vmatpush1.msra.mxu0 0.0
  %267 = vmatprep.subr.mxu0 0.0
  %268 = vmatpush1.msra.mxu0 0.0
  %269 = vmatprep.subr.mxu0 0.0
  %270 = vmatpush1.msra.mxu0 0.0
  %271 = vmatprep.subr.mxu0 0.0
  %272 = vmatpush1.msra.mxu0 0.0
  %273 = vmatprep.subr.mxu0 0.0
  %274 = vmatpush1.msra.mxu0 0.0
  %275 = vmatprep.subr.mxu0 0.0
  %276 = vmatpush1.msra.mxu0 0.0
  %277 = vmatprep.subr.mxu0 0.0
  %278 = vmatpush1.msra.mxu0 0.0
  %279 = vmatprep.subr.mxu0 0.0
  %280 = vmatpush1.msra.mxu0 0.0
  %281 = vmatprep.mubr.f32.mxu0 0.0
  %282 = vmatmul.mubr.f32.gmra.mrb[0].mxu0 %v215
  %v283 = vpop.f32.mrb[0].mxu0
  %v284 = vadd.f32 0.0, %v283
  %v285 = vpop.f32.mrb[0].mxu0
  %v286 = vadd.f32 0.0, %v285
  %287 = vdwg.mxu0
  %v288 = vlaneseq
  %v289 = vshrl.u32 %v288, 7
  %v290 = vsub.s32 0, %v289
  %v291 = vrot.slane %v38, %v290
  %v292 = vadd.f32 %v284, %v291
  %v293 = vxor.u32 %v292, 2147483648
  %v294 = vmul.f32 %v293, 1.442695
  %v295 = vpow.pop %v294
  %v296 = vadd.f32 %v295, 1.0
  %v297 = vrcp.pop %v296
  %v298 = vmul.f32 1.0, %v297
  %v299 = vmul.f32 %v298, 2.0
  %v300 = vsub.f32 %v299, 1.0
  %v301 = vmul.f32 %v298, 0.0
  %303 = vrot.lane.b32.xlu0 %v300, 64
  %v304 = vpop.permute.xlu0 %303
  %v306 = vmul.f32 %v298, %v304
  %308 = vrot.lane.b32.xlu0 %v306, 32
  %v309 = vpop.permute.xlu0 %308
  %v311 = vadd.f32 %v301, %v309
  %v312 = vtanh.pop %v311
  %314 = vrot.lane.b32.xlu0 %v312, 64
  %v315 = vpop.permute.xlu0 %314
  %v317 = vmul.f32 %v298, %v315
  %v318 = vadd.f32 %v148, %v286
  %v319 = vxor.u32 %v318, 2147483648
  %v320 = vmul.f32 %v319, 1.442695
  %v321 = vpow.pop %v320
  %v322 = vadd.f32 %v321, 1.0
  %v323 = vrcp.pop %v322
  %v324 = vmul.f32 1.0, %v323
  %v325 = vmul.f32 %v324, 2.0
  %v326 = vsub.f32 %v325, 1.0
  %v327 = vmul.f32 %v324, %v200
  %329 = vrot.lane.b32.xlu0 %v326, 64
  %v330 = vpop.permute.xlu0 %329
  %v332 = vmul.f32 %v324, %v330
  %334 = vrot.lane.b32.xlu0 %v332, 32
  %v335 = vpop.permute.xlu0 %334
  %v337 = vadd.f32 %v327, %v335
  %v338 = vtanh.pop %v337
  %340 = vrot.lane.b32.xlu0 %v338, 64
  %v341 = vpop.permute.xlu0 %340
  %v343 = vmul.f32 %v324, %v341
  %345 = vrot.lane.b32.xlu0 %v343, 32
  %v346 = vpop.permute.xlu0 %345
  %349 = vrot.lane.b32.xlu0 %v317, 64
  %v350 = vpop.permute.xlu0 %349
  %v352 = vsel %vm211, %v346, %v350
  %v354 = vsel %vm213, %v352, 0
  %356 = vmatprep.subr.mxu0 %v22
  %357 = vmatpush1.msra.mxu0 %v21
  %358 = vmatprep.subr.mxu0 %v24
  %359 = vmatpush1.msra.mxu0 %v23
  %360 = vmatprep.subr.mxu0 %v26
  %361 = vmatpush1.msra.mxu0 %v25
  %362 = vmatprep.subr.mxu0 %v28
  %363 = vmatpush1.msra.mxu0 %v27
  %364 = vmatprep.subr.mxu0 %v30
  %365 = vmatpush1.msra.mxu0 %v29
  %366 = vmatprep.subr.mxu0 %v32
  %367 = vmatpush1.msra.mxu0 %v31
  %368 = vmatprep.subr.mxu0 %v34
  %369 = vmatpush1.msra.mxu0 %v33
  %370 = vmatprep.subr.mxu0 %v36
  %371 = vmatpush1.msra.mxu0 %v35
  %372 = vmatprep.subr.mxu0 0.0
  %373 = vmatpush1.msra.mxu0 0.0
  %374 = vmatprep.subr.mxu0 0.0
  %375 = vmatpush1.msra.mxu0 0.0
  %376 = vmatprep.subr.mxu0 0.0
  %377 = vmatpush1.msra.mxu0 0.0
  %378 = vmatprep.subr.mxu0 0.0
  %379 = vmatpush1.msra.mxu0 0.0
  %380 = vmatprep.subr.mxu0 0.0
  %381 = vmatpush1.msra.mxu0 0.0
  %382 = vmatprep.subr.mxu0 0.0
  %383 = vmatpush1.msra.mxu0 0.0
  %384 = vmatprep.subr.mxu0 0.0
  %385 = vmatpush1.msra.mxu0 0.0
  %386 = vmatprep.subr.mxu0 0.0
  %387 = vmatpush1.msra.mxu0 0.0
  %388 = vmatprep.subr.mxu0 0.0
  %389 = vmatpush1.msra.mxu0 0.0
  %390 = vmatprep.subr.mxu0 0.0
  %391 = vmatpush1.msra.mxu0 0.0
  %392 = vmatprep.subr.mxu0 0.0
  %393 = vmatpush1.msra.mxu0 0.0
  %394 = vmatprep.subr.mxu0 0.0
  %395 = vmatpush1.msra.mxu0 0.0
  %396 = vmatprep.subr.mxu0 0.0
  %397 = vmatpush1.msra.mxu0 0.0
  %398 = vmatprep.subr.mxu0 0.0
  %399 = vmatpush1.msra.mxu0 0.0
  %400 = vmatprep.subr.mxu0 0.0
  %401 = vmatpush1.msra.mxu0 0.0
  %402 = vmatprep.subr.mxu0 0.0
  %403 = vmatpush1.msra.mxu0 0.0
  %404 = vmatprep.subr.mxu0 0.0
  %405 = vmatpush1.msra.mxu0 0.0
  %406 = vmatprep.subr.mxu0 0.0
  %407 = vmatpush1.msra.mxu0 0.0
  %408 = vmatprep.subr.mxu0 0.0
  %409 = vmatpush1.msra.mxu0 0.0
  %410 = vmatprep.subr.mxu0 0.0
  %411 = vmatpush1.msra.mxu0 0.0
  %412 = vmatprep.subr.mxu0 0.0
  %413 = vmatpush1.msra.mxu0 0.0
  %414 = vmatprep.subr.mxu0 0.0
  %415 = vmatpush1.msra.mxu0 0.0
  %416 = vmatprep.subr.mxu0 0.0
  %417 = vmatpush1.msra.mxu0 0.0
  %418 = vmatprep.subr.mxu0 0.0
  %419 = vmatpush1.msra.mxu0 0.0
  %420 = vmatprep.mubr.f32.mxu0 0.0
  %421 = vmatmul.mubr.f32.gmra.mrb[0].mxu0 %v354
  %v422 = vpop.f32.mrb[0].mxu0
  %v423 = vadd.f32 0.0, %v422
  %v424 = vpop.f32.mrb[0].mxu0
  %v425 = vadd.f32 0.0, %v424
  %426 = vdwg.mxu0
  %v427 = vadd.f32 %v423, %v291
  %v428 = vxor.u32 %v427, 2147483648
  %v429 = vmul.f32 %v428, 1.442695
  %v430 = vpow.pop %v429
  %v431 = vadd.f32 %v430, 1.0
  %v432 = vrcp.pop %v431
  %v433 = vmul.f32 1.0, %v432
  %v434 = vmul.f32 %v433, 2.0
  %v435 = vsub.f32 %v434, 1.0
  %v436 = vmul.f32 %v433, %v311
  %438 = vrot.lane.b32.xlu0 %v435, 64
  %v439 = vpop.permute.xlu0 %438
  %v441 = vmul.f32 %v433, %v439
  %443 = vrot.lane.b32.xlu0 %v441, 32
  %v444 = vpop.permute.xlu0 %443
  %v446 = vadd.f32 %v436, %v444
  %v447 = vtanh.pop %v446
  %449 = vrot.lane.b32.xlu0 %v447, 64
  %v450 = vpop.permute.xlu0 %449
  %v452 = vmul.f32 %v433, %v450
  %v453 = vadd.f32 %v153, %v425
  %v454 = vxor.u32 %v453, 2147483648
  %v455 = vmul.f32 %v454, 1.442695
  %v456 = vpow.pop %v455
  %v457 = vadd.f32 %v456, 1.0
  %v458 = vrcp.pop %v457
  %v459 = vmul.f32 1.0, %v458
  %v460 = vmul.f32 %v459, 2.0
  %v461 = vsub.f32 %v460, 1.0
  %v462 = vmul.f32 %v459, %v337
  %464 = vrot.lane.b32.xlu0 %v461, 64
  %v465 = vpop.permute.xlu0 %464
  %v467 = vmul.f32 %v459, %v465
  %469 = vrot.lane.b32.xlu0 %v467, 32
  %v470 = vpop.permute.xlu0 %469
  %v472 = vadd.f32 %v462, %v470
  %v473 = vtanh.pop %v472
  %475 = vrot.lane.b32.xlu0 %v473, 64
  %v476 = vpop.permute.xlu0 %475
  %v478 = vmul.f32 %v459, %v476
  %480 = vrot.lane.b32.xlu0 %v478, 32
  %v481 = vpop.permute.xlu0 %480
  %484 = vrot.lane.b32.xlu0 %v452, 64
  %v485 = vpop.permute.xlu0 %484
  %v487 = vsel %vm211, %v481, %v485
  %v489 = vsel %vm213, %v487, 0
  %491 = vmatprep.subr.mxu0 %v22
  %492 = vmatpush1.msra.mxu0 %v21
  %493 = vmatprep.subr.mxu0 %v24
  %494 = vmatpush1.msra.mxu0 %v23
  %495 = vmatprep.subr.mxu0 %v26
  %496 = vmatpush1.msra.mxu0 %v25
  %497 = vmatprep.subr.mxu0 %v28
  %498 = vmatpush1.msra.mxu0 %v27
  %499 = vmatprep.subr.mxu0 %v30
  %500 = vmatpush1.msra.mxu0 %v29
  %501 = vmatprep.subr.mxu0 %v32
  %502 = vmatpush1.msra.mxu0 %v31
  %503 = vmatprep.subr.mxu0 %v34
  %504 = vmatpush1.msra.mxu0 %v33
  %505 = vmatprep.subr.mxu0 %v36
  %506 = vmatpush1.msra.mxu0 %v35
  %507 = vmatprep.subr.mxu0 0.0
  %508 = vmatpush1.msra.mxu0 0.0
  %509 = vmatprep.subr.mxu0 0.0
  %510 = vmatpush1.msra.mxu0 0.0
  %511 = vmatprep.subr.mxu0 0.0
  %512 = vmatpush1.msra.mxu0 0.0
  %513 = vmatprep.subr.mxu0 0.0
  %514 = vmatpush1.msra.mxu0 0.0
  %515 = vmatprep.subr.mxu0 0.0
  %516 = vmatpush1.msra.mxu0 0.0
  %517 = vmatprep.subr.mxu0 0.0
  %518 = vmatpush1.msra.mxu0 0.0
  %519 = vmatprep.subr.mxu0 0.0
  %520 = vmatpush1.msra.mxu0 0.0
  %521 = vmatprep.subr.mxu0 0.0
  %522 = vmatpush1.msra.mxu0 0.0
  %523 = vmatprep.subr.mxu0 0.0
  %524 = vmatpush1.msra.mxu0 0.0
  %525 = vmatprep.subr.mxu0 0.0
  %526 = vmatpush1.msra.mxu0 0.0
  %527 = vmatprep.subr.mxu0 0.0
  %528 = vmatpush1.msra.mxu0 0.0
  %529 = vmatprep.subr.mxu0 0.0
  %530 = vmatpush1.msra.mxu0 0.0
  %531 = vmatprep.subr.mxu0 0.0
  %532 = vmatpush1.msra.mxu0 0.0
  %533 = vmatprep.subr.mxu0 0.0
  %534 = vmatpush1.msra.mxu0 0.0
  %535 = vmatprep.subr.mxu0 0.0
  %536 = vmatpush1.msra.mxu0 0.0
  %537 = vmatprep.subr.mxu0 0.0
  %538 = vmatpush1.msra.mxu0 0.0
  %539 = vmatprep.subr.mxu0 0.0
  %540 = vmatpush1.msra.mxu0 0.0
  %541 = vmatprep.subr.mxu0 0.0
  %542 = vmatpush1.msra.mxu0 0.0
  %543 = vmatprep.subr.mxu0 0.0
  %544 = vmatpush1.msra.mxu0 0.0
  %545 = vmatprep.subr.mxu0 0.0
  %546 = vmatpush1.msra.mxu0 0.0
  %547 = vmatprep.subr.mxu0 0.0
  %548 = vmatpush1.msra.mxu0 0.0
  %549 = vmatprep.subr.mxu0 0.0
  %550 = vmatpush1.msra.mxu0 0.0
  %551 = vmatprep.subr.mxu0 0.0
  %552 = vmatpush1.msra.mxu0 0.0
  %553 = vmatprep.subr.mxu0 0.0
  %554 = vmatpush1.msra.mxu0 0.0
  %555 = vmatprep.mubr.f32.mxu0 0.0
  %556 = vmatmul.mubr.f32.gmra.mrb[0].mxu0 %v489
  %v557 = vpop.f32.mrb[0].mxu0
  %v558 = vadd.f32 0.0, %v557
  %v559 = vpop.f32.mrb[0].mxu0
  %v560 = vadd.f32 0.0, %v559
  %561 = vdwg.mxu0
  %v562 = vadd.f32 %v558, %v291
  %v563 = vxor.u32 %v562, 2147483648
  %v564 = vmul.f32 %v563, 1.442695
  %v565 = vpow.pop %v564
  %v566 = vadd.f32 %v565, 1.0
  %v567 = vrcp.pop %v566
  %v568 = vmul.f32 1.0, %v567
  %v569 = vmul.f32 %v568, 2.0
  %v570 = vsub.f32 %v569, 1.0
  %v571 = vmul.f32 %v568, %v446
  %573 = vrot.lane.b32.xlu0 %v570, 64
  %v574 = vpop.permute.xlu0 %573
  %v576 = vmul.f32 %v568, %v574
  %578 = vrot.lane.b32.xlu0 %v576, 32
  %v579 = vpop.permute.xlu0 %578
  %v581 = vadd.f32 %v571, %v579
  %v582 = vtanh.pop %v581
  %584 = vrot.lane.b32.xlu0 %v582, 64
  %v585 = vpop.permute.xlu0 %584
  %v587 = vmul.f32 %v568, %v585
  %v588 = vadd.f32 %v158, %v560
  %v589 = vxor.u32 %v588, 2147483648
  %v590 = vmul.f32 %v589, 1.442695
  %v591 = vpow.pop %v590
  %v592 = vadd.f32 %v591, 1.0
  %v593 = vrcp.pop %v592
  %v594 = vmul.f32 1.0, %v593
  %v595 = vmul.f32 %v594, 2.0
  %v596 = vsub.f32 %v595, 1.0
  %v597 = vmul.f32 %v594, %v472
  %599 = vrot.lane.b32.xlu0 %v596, 64
  %v600 = vpop.permute.xlu0 %599
  %v602 = vmul.f32 %v594, %v600
  %604 = vrot.lane.b32.xlu0 %v602, 32
  %v605 = vpop.permute.xlu0 %604
  %v607 = vadd.f32 %v597, %v605
  %v608 = vtanh.pop %v607
  %610 = vrot.lane.b32.xlu0 %v608, 64
  %v611 = vpop.permute.xlu0 %610
  %v613 = vmul.f32 %v594, %v611
  %615 = vrot.lane.b32.xlu0 %v613, 32
  %v616 = vpop.permute.xlu0 %615
  %619 = vrot.lane.b32.xlu0 %v587, 64
  %v620 = vpop.permute.xlu0 %619
  %v622 = vsel %vm211, %v616, %v620
  %v624 = vsel %vm213, %v622, 0
  %626 = vmatprep.subr.mxu0 %v22
  %627 = vmatpush1.msra.mxu0 %v21
  %628 = vmatprep.subr.mxu0 %v24
  %629 = vmatpush1.msra.mxu0 %v23
  %630 = vmatprep.subr.mxu0 %v26
  %631 = vmatpush1.msra.mxu0 %v25
  %632 = vmatprep.subr.mxu0 %v28
  %633 = vmatpush1.msra.mxu0 %v27
  %634 = vmatprep.subr.mxu0 %v30
  %635 = vmatpush1.msra.mxu0 %v29
  %636 = vmatprep.subr.mxu0 %v32
  %637 = vmatpush1.msra.mxu0 %v31
  %638 = vmatprep.subr.mxu0 %v34
  %639 = vmatpush1.msra.mxu0 %v33
  %640 = vmatprep.subr.mxu0 %v36
  %641 = vmatpush1.msra.mxu0 %v35
  %642 = vmatprep.subr.mxu0 0.0
  %643 = vmatpush1.msra.mxu0 0.0
  %644 = vmatprep.subr.mxu0 0.0
  %645 = vmatpush1.msra.mxu0 0.0
  %646 = vmatprep.subr.mxu0 0.0
  %647 = vmatpush1.msra.mxu0 0.0
  %648 = vmatprep.subr.mxu0 0.0
  %649 = vmatpush1.msra.mxu0 0.0
  %650 = vmatprep.subr.mxu0 0.0
  %651 = vmatpush1.msra.mxu0 0.0
  %652 = vmatprep.subr.mxu0 0.0
  %653 = vmatpush1.msra.mxu0 0.0
  %654 = vmatprep.subr.mxu0 0.0
  %655 = vmatpush1.msra.mxu0 0.0
  %656 = vmatprep.subr.mxu0 0.0
  %657 = vmatpush1.msra.mxu0 0.0
  %658 = vmatprep.subr.mxu0 0.0
  %659 = vmatpush1.msra.mxu0 0.0
  %660 = vmatprep.subr.mxu0 0.0
  %661 = vmatpush1.msra.mxu0 0.0
  %662 = vmatprep.subr.mxu0 0.0
  %663 = vmatpush1.msra.mxu0 0.0
  %664 = vmatprep.subr.mxu0 0.0
  %665 = vmatpush1.msra.mxu0 0.0
  %666 = vmatprep.subr.mxu0 0.0
  %667 = vmatpush1.msra.mxu0 0.0
  %668 = vmatprep.subr.mxu0 0.0
  %669 = vmatpush1.msra.mxu0 0.0
  %670 = vmatprep.subr.mxu0 0.0
  %671 = vmatpush1.msra.mxu0 0.0
  %672 = vmatprep.subr.mxu0 0.0
  %673 = vmatpush1.msra.mxu0 0.0
  %674 = vmatprep.subr.mxu0 0.0
  %675 = vmatpush1.msra.mxu0 0.0
  %676 = vmatprep.subr.mxu0 0.0
  %677 = vmatpush1.msra.mxu0 0.0
  %678 = vmatprep.subr.mxu0 0.0
  %679 = vmatpush1.msra.mxu0 0.0
  %680 = vmatprep.subr.mxu0 0.0
  %681 = vmatpush1.msra.mxu0 0.0
  %682 = vmatprep.subr.mxu0 0.0
  %683 = vmatpush1.msra.mxu0 0.0
  %684 = vmatprep.subr.mxu0 0.0
  %685 = vmatpush1.msra.mxu0 0.0
  %686 = vmatprep.subr.mxu0 0.0
  %687 = vmatpush1.msra.mxu0 0.0
  %688 = vmatprep.subr.mxu0 0.0
  %689 = vmatpush1.msra.mxu0 0.0
  %690 = vmatprep.mubr.f32.mxu0 0.0
  %691 = vmatmul.mubr.f32.gmra.mrb[0].mxu0 %v624
  %v692 = vpop.f32.mrb[0].mxu0
  %v693 = vadd.f32 0.0, %v692
  %v694 = vpop.f32.mrb[0].mxu0
  %v695 = vadd.f32 0.0, %v694
  %696 = vdwg.mxu0
  %v697 = vadd.f32 %v693, %v291
  %v698 = vxor.u32 %v697, 2147483648
  %v699 = vmul.f32 %v698, 1.442695
  %v700 = vpow.pop %v699
  %v701 = vadd.f32 %v700, 1.0
  %v702 = vrcp.pop %v701
  %v703 = vmul.f32 1.0, %v702
  %v704 = vmul.f32 %v703, 2.0
  %v705 = vsub.f32 %v704, 1.0
  %v706 = vmul.f32 %v703, %v581
  %708 = vrot.lane.b32.xlu0 %v705, 64
  %v709 = vpop.permute.xlu0 %708
  %v711 = vmul.f32 %v703, %v709
  %713 = vrot.lane.b32.xlu0 %v711, 32
  %v714 = vpop.permute.xlu0 %713
  %v716 = vadd.f32 %v706, %v714
  %v717 = vtanh.pop %v716
  %719 = vrot.lane.b32.xlu0 %v717, 64
  %v720 = vpop.permute.xlu0 %719
  %v722 = vmul.f32 %v703, %v720
  %v723 = vadd.f32 %v163, %v695
  %v724 = vxor.u32 %v723, 2147483648
  %v725 = vmul.f32 %v724, 1.442695
  %v726 = vpow.pop %v725
  %v727 = vadd.f32 %v726, 1.0
  %v728 = vrcp.pop %v727
  %v729 = vmul.f32 1.0, %v728
  %v730 = vmul.f32 %v729, 2.0
  %v731 = vsub.f32 %v730, 1.0
  %v732 = vmul.f32 %v729, %v607
  %734 = vrot.lane.b32.xlu0 %v731, 64
  %v735 = vpop.permute.xlu0 %734
  %v737 = vmul.f32 %v729, %v735
  %739 = vrot.lane.b32.xlu0 %v737, 32
  %v740 = vpop.permute.xlu0 %739
  %v742 = vadd.f32 %v732, %v740
  %v743 = vtanh.pop %v742
  %745 = vrot.lane.b32.xlu0 %v743, 64
  %v746 = vpop.permute.xlu0 %745
  %v748 = vmul.f32 %v729, %v746
  %750 = vrot.lane.b32.xlu0 %v748, 32
  %v751 = vpop.permute.xlu0 %750
  %754 = vrot.lane.b32.xlu0 %v722, 64
  %v755 = vpop.permute.xlu0 %754
  %v757 = vsel %vm211, %v751, %v755
  %v759 = vsel %vm213, %v757, 0
  %761 = vmatprep.subr.mxu0 %v22
  %762 = vmatpush1.msra.mxu0 %v21
  %763 = vmatprep.subr.mxu0 %v24
  %764 = vmatpush1.msra.mxu0 %v23
  %765 = vmatprep.subr.mxu0 %v26
  %766 = vmatpush1.msra.mxu0 %v25
  %767 = vmatprep.subr.mxu0 %v28
  %768 = vmatpush1.msra.mxu0 %v27
  %769 = vmatprep.subr.mxu0 %v30
  %770 = vmatpush1.msra.mxu0 %v29
  %771 = vmatprep.subr.mxu0 %v32
  %772 = vmatpush1.msra.mxu0 %v31
  %773 = vmatprep.subr.mxu0 %v34
  %774 = vmatpush1.msra.mxu0 %v33
  %775 = vmatprep.subr.mxu0 %v36
  %776 = vmatpush1.msra.mxu0 %v35
  %777 = vmatprep.subr.mxu0 0.0
  %778 = vmatpush1.msra.mxu0 0.0
  %779 = vmatprep.subr.mxu0 0.0
  %780 = vmatpush1.msra.mxu0 0.0
  %781 = vmatprep.subr.mxu0 0.0
  %782 = vmatpush1.msra.mxu0 0.0
  %783 = vmatprep.subr.mxu0 0.0
  %784 = vmatpush1.msra.mxu0 0.0
  %785 = vmatprep.subr.mxu0 0.0
  %786 = vmatpush1.msra.mxu0 0.0
  %787 = vmatprep.subr.mxu0 0.0
  %788 = vmatpush1.msra.mxu0 0.0
  %789 = vmatprep.subr.mxu0 0.0
  %790 = vmatpush1.msra.mxu0 0.0
  %791 = vmatprep.subr.mxu0 0.0
  %792 = vmatpush1.msra.mxu0 0.0
  %793 = vmatprep.subr.mxu0 0.0
  %794 = vmatpush1.msra.mxu0 0.0
  %795 = vmatprep.subr.mxu0 0.0
  %796 = vmatpush1.msra.mxu0 0.0
  %797 = vmatprep.subr.mxu0 0.0
  %798 = vmatpush1.msra.mxu0 0.0
  %799 = vmatprep.subr.mxu0 0.0
  %800 = vmatpush1.msra.mxu0 0.0
  %801 = vmatprep.subr.mxu0 0.0
  %802 = vmatpush1.msra.mxu0 0.0
  %803 = vmatprep.subr.mxu0 0.0
  %804 = vmatpush1.msra.mxu0 0.0
  %805 = vmatprep.subr.mxu0 0.0
  %806 = vmatpush1.msra.mxu0 0.0
  %807 = vmatprep.subr.mxu0 0.0
  %808 = vmatpush1.msra.mxu0 0.0
  %809 = vmatprep.subr.mxu0 0.0
  %810 = vmatpush1.msra.mxu0 0.0
  %811 = vmatprep.subr.mxu0 0.0
  %812 = vmatpush1.msra.mxu0 0.0
  %813 = vmatprep.subr.mxu0 0.0
  %814 = vmatpush1.msra.mxu0 0.0
  %815 = vmatprep.subr.mxu0 0.0
  %816 = vmatpush1.msra.mxu0 0.0
  %817 = vmatprep.subr.mxu0 0.0
  %818 = vmatpush1.msra.mxu0 0.0
  %819 = vmatprep.subr.mxu0 0.0
  %820 = vmatpush1.msra.mxu0 0.0
  %821 = vmatprep.subr.mxu0 0.0
  %822 = vmatpush1.msra.mxu0 0.0
  %823 = vmatprep.subr.mxu0 0.0
  %824 = vmatpush1.msra.mxu0 0.0
  %825 = vmatprep.mubr.f32.mxu0 0.0
  %826 = vmatmul.mubr.f32.gmra.mrb[0].mxu0 %v759
  %v827 = vpop.f32.mrb[0].mxu0
  %v828 = vadd.f32 0.0, %v827
  %v829 = vpop.f32.mrb[0].mxu0
  %v830 = vadd.f32 0.0, %v829
  %831 = vdwg.mxu0
  %v832 = vadd.f32 %v828, %v291
  %v833 = vxor.u32 %v832, 2147483648
  %v834 = vmul.f32 %v833, 1.442695
  %v835 = vpow.pop %v834
  %v836 = vadd.f32 %v835, 1.0
  %v837 = vrcp.pop %v836
  %v838 = vmul.f32 1.0, %v837
  %v839 = vmul.f32 %v838, 2.0
  %v840 = vsub.f32 %v839, 1.0
  %v841 = vmul.f32 %v838, %v716
  %843 = vrot.lane.b32.xlu0 %v840, 64
  %v844 = vpop.permute.xlu0 %843
  %v846 = vmul.f32 %v838, %v844
  %848 = vrot.lane.b32.xlu0 %v846, 32
  %v849 = vpop.permute.xlu0 %848
  %v851 = vadd.f32 %v841, %v849
  %v852 = vtanh.pop %v851
  %854 = vrot.lane.b32.xlu0 %v852, 64
  %v855 = vpop.permute.xlu0 %854
  %v857 = vmul.f32 %v838, %v855
  %v858 = vadd.f32 %v168, %v830
  %v859 = vxor.u32 %v858, 2147483648
  %v860 = vmul.f32 %v859, 1.442695
  %v861 = vpow.pop %v860
  %v862 = vadd.f32 %v861, 1.0
  %v863 = vrcp.pop %v862
  %v864 = vmul.f32 1.0, %v863
  %v865 = vmul.f32 %v864, 2.0
  %v866 = vsub.f32 %v865, 1.0
  %v867 = vmul.f32 %v864, %v742
  %869 = vrot.lane.b32.xlu0 %v866, 64
  %v870 = vpop.permute.xlu0 %869
  %v872 = vmul.f32 %v864, %v870
  %874 = vrot.lane.b32.xlu0 %v872, 32
  %v875 = vpop.permute.xlu0 %874
  %v877 = vadd.f32 %v867, %v875
  %v878 = vtanh.pop %v877
  %880 = vrot.lane.b32.xlu0 %v878, 64
  %v881 = vpop.permute.xlu0 %880
  %v883 = vmul.f32 %v864, %v881
  %885 = vrot.lane.b32.xlu0 %v883, 32
  %v886 = vpop.permute.xlu0 %885
  %889 = vrot.lane.b32.xlu0 %v857, 64
  %v890 = vpop.permute.xlu0 %889
  %v892 = vsel %vm211, %v886, %v890
  %v894 = vsel %vm213, %v892, 0
  %896 = vmatprep.subr.mxu0 %v22
  %897 = vmatpush1.msra.mxu0 %v21
  %898 = vmatprep.subr.mxu0 %v24
  %899 = vmatpush1.msra.mxu0 %v23
  %900 = vmatprep.subr.mxu0 %v26
  %901 = vmatpush1.msra.mxu0 %v25
  %902 = vmatprep.subr.mxu0 %v28
  %903 = vmatpush1.msra.mxu0 %v27
  %904 = vmatprep.subr.mxu0 %v30
  %905 = vmatpush1.msra.mxu0 %v29
  %906 = vmatprep.subr.mxu0 %v32
  %907 = vmatpush1.msra.mxu0 %v31
  %908 = vmatprep.subr.mxu0 %v34
  %909 = vmatpush1.msra.mxu0 %v33
  %910 = vmatprep.subr.mxu0 %v36
  %911 = vmatpush1.msra.mxu0 %v35
  %912 = vmatprep.subr.mxu0 0.0
  %913 = vmatpush1.msra.mxu0 0.0
  %914 = vmatprep.subr.mxu0 0.0
  %915 = vmatpush1.msra.mxu0 0.0
  %916 = vmatprep.subr.mxu0 0.0
  %917 = vmatpush1.msra.mxu0 0.0
  %918 = vmatprep.subr.mxu0 0.0
  %919 = vmatpush1.msra.mxu0 0.0
  %920 = vmatprep.subr.mxu0 0.0
  %921 = vmatpush1.msra.mxu0 0.0
  %922 = vmatprep.subr.mxu0 0.0
  %923 = vmatpush1.msra.mxu0 0.0
  %924 = vmatprep.subr.mxu0 0.0
  %925 = vmatpush1.msra.mxu0 0.0
  %926 = vmatprep.subr.mxu0 0.0
  %927 = vmatpush1.msra.mxu0 0.0
  %928 = vmatprep.subr.mxu0 0.0
  %929 = vmatpush1.msra.mxu0 0.0
  %930 = vmatprep.subr.mxu0 0.0
  %931 = vmatpush1.msra.mxu0 0.0
  %932 = vmatprep.subr.mxu0 0.0
  %933 = vmatpush1.msra.mxu0 0.0
  %934 = vmatprep.subr.mxu0 0.0
  %935 = vmatpush1.msra.mxu0 0.0
  %936 = vmatprep.subr.mxu0 0.0
  %937 = vmatpush1.msra.mxu0 0.0
  %938 = vmatprep.subr.mxu0 0.0
  %939 = vmatpush1.msra.mxu0 0.0
  %940 = vmatprep.subr.mxu0 0.0
  %941 = vmatpush1.msra.mxu0 0.0
  %942 = vmatprep.subr.mxu0 0.0
  %943 = vmatpush1.msra.mxu0 0.0
  %944 = vmatprep.subr.mxu0 0.0
  %945 = vmatpush1.msra.mxu0 0.0
  %946 = vmatprep.subr.mxu0 0.0
  %947 = vmatpush1.msra.mxu0 0.0
  %948 = vmatprep.subr.mxu0 0.0
  %949 = vmatpush1.msra.mxu0 0.0
  %950 = vmatprep.subr.mxu0 0.0
  %951 = vmatpush1.msra.mxu0 0.0
  %952 = vmatprep.subr.mxu0 0.0
  %953 = vmatpush1.msra.mxu0 0.0
  %954 = vmatprep.subr.mxu0 0.0
  %955 = vmatpush1.msra.mxu0 0.0
  %956 = vmatprep.subr.mxu0 0.0
  %957 = vmatpush1.msra.mxu0 0.0
  %958 = vmatprep.subr.mxu0 0.0
  %959 = vmatpush1.msra.mxu0 0.0
  %960 = vmatprep.mubr.f32.mxu0 0.0
  %961 = vmatmul.mubr.f32.gmra.mrb[0].mxu0 %v894
  %v962 = vpop.f32.mrb[0].mxu0
  %v963 = vadd.f32 0.0, %v962
  %v964 = vpop.f32.mrb[0].mxu0
  %v965 = vadd.f32 0.0, %v964
  %966 = vdwg.mxu0
  %v967 = vadd.f32 %v963, %v291
  %v968 = vxor.u32 %v967, 2147483648
  %v969 = vmul.f32 %v968, 1.442695
  %v970 = vpow.pop %v969
  %v971 = vadd.f32 %v970, 1.0
  %v972 = vrcp.pop %v971
  %v973 = vmul.f32 1.0, %v972
  %v974 = vmul.f32 %v973, 2.0
  %v975 = vsub.f32 %v974, 1.0
  %v976 = vmul.f32 %v973, %v851
  %978 = vrot.lane.b32.xlu0 %v975, 64
  %v979 = vpop.permute.xlu0 %978
  %v981 = vmul.f32 %v973, %v979
  %983 = vrot.lane.b32.xlu0 %v981, 32
  %v984 = vpop.permute.xlu0 %983
  %v986 = vadd.f32 %v976, %v984
  %v987 = vtanh.pop %v986
  %989 = vrot.lane.b32.xlu0 %v987, 64
  %v990 = vpop.permute.xlu0 %989
  %v992 = vmul.f32 %v973, %v990
  %v993 = vadd.f32 %v173, %v965
  %v994 = vxor.u32 %v993, 2147483648
  %v995 = vmul.f32 %v994, 1.442695
  %v996 = vpow.pop %v995
  %v997 = vadd.f32 %v996, 1.0
  %v998 = vrcp.pop %v997
  %v999 = vmul.f32 1.0, %v998
  %v1000 = vmul.f32 %v999, 2.0
  %v1001 = vsub.f32 %v1000, 1.0
  %v1002 = vmul.f32 %v999, %v877
  %1004 = vrot.lane.b32.xlu0 %v1001, 64
  %v1005 = vpop.permute.xlu0 %1004
  %v1007 = vmul.f32 %v999, %v1005
  %1009 = vrot.lane.b32.xlu0 %v1007, 32
  %v1010 = vpop.permute.xlu0 %1009
  %v1012 = vadd.f32 %v1002, %v1010
  %v1013 = vtanh.pop %v1012
  %1015 = vrot.lane.b32.xlu0 %v1013, 64
  %v1016 = vpop.permute.xlu0 %1015
  %v1018 = vmul.f32 %v999, %v1016
  %1020 = vrot.lane.b32.xlu0 %v1018, 32
  %v1021 = vpop.permute.xlu0 %1020
  %1024 = vrot.lane.b32.xlu0 %v992, 64
  %v1025 = vpop.permute.xlu0 %1024
  %v1027 = vsel %vm211, %v1021, %v1025
  %v1029 = vsel %vm213, %v1027, 0
  %1031 = vmatprep.subr.mxu0 %v22
  %1032 = vmatpush1.msra.mxu0 %v21
  %1033 = vmatprep.subr.mxu0 %v24
  %1034 = vmatpush1.msra.mxu0 %v23
  %1035 = vmatprep.subr.mxu0 %v26
  %1036 = vmatpush1.msra.mxu0 %v25
  %1037 = vmatprep.subr.mxu0 %v28
  %1038 = vmatpush1.msra.mxu0 %v27
  %1039 = vmatprep.subr.mxu0 %v30
  %1040 = vmatpush1.msra.mxu0 %v29
  %1041 = vmatprep.subr.mxu0 %v32
  %1042 = vmatpush1.msra.mxu0 %v31
  %1043 = vmatprep.subr.mxu0 %v34
  %1044 = vmatpush1.msra.mxu0 %v33
  %1045 = vmatprep.subr.mxu0 %v36
  %1046 = vmatpush1.msra.mxu0 %v35
  %1047 = vmatprep.subr.mxu0 0.0
  %1048 = vmatpush1.msra.mxu0 0.0
  %1049 = vmatprep.subr.mxu0 0.0
  %1050 = vmatpush1.msra.mxu0 0.0
  %1051 = vmatprep.subr.mxu0 0.0
  %1052 = vmatpush1.msra.mxu0 0.0
  %1053 = vmatprep.subr.mxu0 0.0
  %1054 = vmatpush1.msra.mxu0 0.0
  %1055 = vmatprep.subr.mxu0 0.0
  %1056 = vmatpush1.msra.mxu0 0.0
  %1057 = vmatprep.subr.mxu0 0.0
  %1058 = vmatpush1.msra.mxu0 0.0
  %1059 = vmatprep.subr.mxu0 0.0
  %1060 = vmatpush1.msra.mxu0 0.0
  %1061 = vmatprep.subr.mxu0 0.0
  %1062 = vmatpush1.msra.mxu0 0.0
  %1063 = vmatprep.subr.mxu0 0.0
  %1064 = vmatpush1.msra.mxu0 0.0
  %1065 = vmatprep.subr.mxu0 0.0
  %1066 = vmatpush1.msra.mxu0 0.0
  %1067 = vmatprep.subr.mxu0 0.0
  %1068 = vmatpush1.msra.mxu0 0.0
  %1069 = vmatprep.subr.mxu0 0.0
  %1070 = vmatpush1.msra.mxu0 0.0
  %1071 = vmatprep.subr.mxu0 0.0
  %1072 = vmatpush1.msra.mxu0 0.0
  %1073 = vmatprep.subr.mxu0 0.0
  %1074 = vmatpush1.msra.mxu0 0.0
  %1075 = vmatprep.subr.mxu0 0.0
  %1076 = vmatpush1.msra.mxu0 0.0
  %1077 = vmatprep.subr.mxu0 0.0
  %1078 = vmatpush1.msra.mxu0 0.0
  %1079 = vmatprep.subr.mxu0 0.0
  %1080 = vmatpush1.msra.mxu0 0.0
  %1081 = vmatprep.subr.mxu0 0.0
  %1082 = vmatpush1.msra.mxu0 0.0
  %1083 = vmatprep.subr.mxu0 0.0
  %1084 = vmatpush1.msra.mxu0 0.0
  %1085 = vmatprep.subr.mxu0 0.0
  %1086 = vmatpush1.msra.mxu0 0.0
  %1087 = vmatprep.subr.mxu0 0.0
  %1088 = vmatpush1.msra.mxu0 0.0
  %1089 = vmatprep.subr.mxu0 0.0
  %1090 = vmatpush1.msra.mxu0 0.0
  %1091 = vmatprep.subr.mxu0 0.0
  %1092 = vmatpush1.msra.mxu0 0.0
  %1093 = vmatprep.subr.mxu0 0.0
  %1094 = vmatpush1.msra.mxu0 0.0
  %1095 = vmatprep.mubr.f32.mxu0 0.0
  %1096 = vmatmul.mubr.f32.gmra.mrb[0].mxu0 %v1029
  %v1097 = vpop.f32.mrb[0].mxu0
  %v1098 = vadd.f32 0.0, %v1097
  %v1099 = vpop.f32.mrb[0].mxu0
  %v1100 = vadd.f32 0.0, %v1099
  %1101 = vdwg.mxu0
  %v1102 = vadd.f32 %v1098, %v291
  %v1103 = vxor.u32 %v1102, 2147483648
  %v1104 = vmul.f32 %v1103, 1.442695
  %v1105 = vpow.pop %v1104
  %v1106 = vadd.f32 %v1105, 1.0
  %v1107 = vrcp.pop %v1106
  %v1108 = vmul.f32 1.0, %v1107
  %v1109 = vmul.f32 %v1108, 2.0
  %v1110 = vsub.f32 %v1109, 1.0
  %v1111 = vmul.f32 %v1108, %v986
  %1113 = vrot.lane.b32.xlu0 %v1110, 64
  %v1114 = vpop.permute.xlu0 %1113
  %v1116 = vmul.f32 %v1108, %v1114
  %1118 = vrot.lane.b32.xlu0 %v1116, 32
  %v1119 = vpop.permute.xlu0 %1118
  %v1121 = vadd.f32 %v1111, %v1119
  %v1122 = vtanh.pop %v1121
  %1124 = vrot.lane.b32.xlu0 %v1122, 64
  %v1125 = vpop.permute.xlu0 %1124
  %v1127 = vmul.f32 %v1108, %v1125
  %v1128 = vadd.f32 %v178, %v1100
  %v1129 = vxor.u32 %v1128, 2147483648
  %v1130 = vmul.f32 %v1129, 1.442695
  %v1131 = vpow.pop %v1130
  %v1132 = vadd.f32 %v1131, 1.0
  %v1133 = vrcp.pop %v1132
  %v1134 = vmul.f32 1.0, %v1133
  %v1135 = vmul.f32 %v1134, 2.0
  %v1136 = vsub.f32 %v1135, 1.0
  %v1137 = vmul.f32 %v1134, %v1012
  %1139 = vrot.lane.b32.xlu0 %v1136, 64
  %v1140 = vpop.permute.xlu0 %1139
  %v1142 = vmul.f32 %v1134, %v1140
  %1144 = vrot.lane.b32.xlu0 %v1142, 32
  %v1145 = vpop.permute.xlu0 %1144
  %v1147 = vadd.f32 %v1137, %v1145
  %v1148 = vtanh.pop %v1147
  %1150 = vrot.lane.b32.xlu0 %v1148, 64
  %v1151 = vpop.permute.xlu0 %1150
  %v1153 = vmul.f32 %v1134, %v1151
  %1155 = vrot.lane.b32.xlu0 %v1153, 32
  %v1156 = vpop.permute.xlu0 %1155
  %1159 = vrot.lane.b32.xlu0 %v1127, 64
  %v1160 = vpop.permute.xlu0 %1159
  %v1162 = vsel %vm211, %v1156, %v1160
  %v1164 = vsel %vm213, %v1162, 0
  %1166 = vmatprep.subr.mxu0 %v22
  %1167 = vmatpush1.msra.mxu0 %v21
  %1168 = vmatprep.subr.mxu0 %v24
  %1169 = vmatpush1.msra.mxu0 %v23
  %1170 = vmatprep.subr.mxu0 %v26
  %1171 = vmatpush1.msra.mxu0 %v25
  %1172 = vmatprep.subr.mxu0 %v28
  %1173 = vmatpush1.msra.mxu0 %v27
  %1174 = vmatprep.subr.mxu0 %v30
  %1175 = vmatpush1.msra.mxu0 %v29
  %1176 = vmatprep.subr.mxu0 %v32
  %1177 = vmatpush1.msra.mxu0 %v31
  %1178 = vmatprep.subr.mxu0 %v34
  %1179 = vmatpush1.msra.mxu0 %v33
  %1180 = vmatprep.subr.mxu0 %v36
  %1181 = vmatpush1.msra.mxu0 %v35
  %1182 = vmatprep.subr.mxu0 0.0
  %1183 = vmatpush1.msra.mxu0 0.0
  %1184 = vmatprep.subr.mxu0 0.0
  %1185 = vmatpush1.msra.mxu0 0.0
  %1186 = vmatprep.subr.mxu0 0.0
  %1187 = vmatpush1.msra.mxu0 0.0
  %1188 = vmatprep.subr.mxu0 0.0
  %1189 = vmatpush1.msra.mxu0 0.0
  %1190 = vmatprep.subr.mxu0 0.0
  %1191 = vmatpush1.msra.mxu0 0.0
  %1192 = vmatprep.subr.mxu0 0.0
  %1193 = vmatpush1.msra.mxu0 0.0
  %1194 = vmatprep.subr.mxu0 0.0
  %1195 = vmatpush1.msra.mxu0 0.0
  %1196 = vmatprep.subr.mxu0 0.0
  %1197 = vmatpush1.msra.mxu0 0.0
  %1198 = vmatprep.subr.mxu0 0.0
  %1199 = vmatpush1.msra.mxu0 0.0
  %1200 = vmatprep.subr.mxu0 0.0
  %1201 = vmatpush1.msra.mxu0 0.0
  %1202 = vmatprep.subr.mxu0 0.0
  %1203 = vmatpush1.msra.mxu0 0.0
  %1204 = vmatprep.subr.mxu0 0.0
  %1205 = vmatpush1.msra.mxu0 0.0
  %1206 = vmatprep.subr.mxu0 0.0
  %1207 = vmatpush1.msra.mxu0 0.0
  %1208 = vmatprep.subr.mxu0 0.0
  %1209 = vmatpush1.msra.mxu0 0.0
  %1210 = vmatprep.subr.mxu0 0.0
  %1211 = vmatpush1.msra.mxu0 0.0
  %1212 = vmatprep.subr.mxu0 0.0
  %1213 = vmatpush1.msra.mxu0 0.0
  %1214 = vmatprep.subr.mxu0 0.0
  %1215 = vmatpush1.msra.mxu0 0.0
  %1216 = vmatprep.subr.mxu0 0.0
  %1217 = vmatpush1.msra.mxu0 0.0
  %1218 = vmatprep.subr.mxu0 0.0
  %1219 = vmatpush1.msra.mxu0 0.0
  %1220 = vmatprep.subr.mxu0 0.0
  %1221 = vmatpush1.msra.mxu0 0.0
  %1222 = vmatprep.subr.mxu0 0.0
  %1223 = vmatpush1.msra.mxu0 0.0
  %1224 = vmatprep.subr.mxu0 0.0
  %1225 = vmatpush1.msra.mxu0 0.0
  %1226 = vmatprep.subr.mxu0 0.0
  %1227 = vmatpush1.msra.mxu0 0.0
  %1228 = vmatprep.subr.mxu0 0.0
  %1229 = vmatpush1.msra.mxu0 0.0
  %1230 = vmatprep.mubr.f32.mxu0 0.0
  %1231 = vmatmul.mubr.f32.gmra.mrb[0].mxu0 %v1164
  %v1232 = vpop.f32.mrb[0].mxu0
  %v1233 = vadd.f32 0.0, %v1232
  %v1234 = vpop.f32.mrb[0].mxu0
  %1235 = vdwg.mxu0
  %v1236 = vadd.f32 %v1233, %v291
  %v1237 = vxor.u32 %v1236, 2147483648
  %v1238 = vmul.f32 %v1237, 1.442695
  %v1239 = vpow.pop %v1238
  %v1240 = vadd.f32 %v1239, 1.0
  %v1241 = vrcp.pop %v1240
  %v1242 = vmul.f32 1.0, %v1241
  %v1243 = vmul.f32 %v1242, 2.0
  %v1244 = vsub.f32 %v1243, 1.0
  %v1245 = vmul.f32 %v1242, %v1121
  %1247 = vrot.lane.b32.xlu0 %v1244, 64
  %v1248 = vpop.permute.xlu0 %1247
  %v1250 = vmul.f32 %v1242, %v1248
  %1252 = vrot.lane.b32.xlu0 %v1250, 32
  %v1253 = vpop.permute.xlu0 %1252
  %v1255 = vadd.f32 %v1245, %v1253
  %v1256 = vtanh.pop %v1255
  %1258 = vrot.lane.b32.xlu0 %v1256, 64
  %v1259 = vpop.permute.xlu0 %1258
  %v1261 = vmul.f32 %v1242, %v1259
  %1262 = vrot.lane.b32.xlu0 %v317, 32
  %v1263 = vpop.permute.xlu0 %1262
  %1265 = vrot.lane.b32.xlu0 %v587, 96
  %v1266 = vpop.permute.xlu0 %1265
  %1268 = vrot.lane.b32.xlu0 %v857, 32
  %v1269 = vpop.permute.xlu0 %1268
  %1271 = vrot.lane.b32.xlu0 %v1127, 96
  %v1272 = vpop.permute.xlu0 %1271
  %v1274 = vsel %vm211, %v1263, %v485
  %v1275 = vsel %vm213, %v1274, %v1266
  %vm1276 = vcmask 785408
  %v1277 = vsel %vm1276, %v1275, %v722
  %v1278 = vsel %vm211, %v1269, %v1025
  %v1279 = vsel %vm213, %v1278, %v1272
  %v1280 = vsel %vm1276, %v1279, %v1261
  %v1281 = vld [vmem:[%s2] sm:$0xff]
  %v1282 = vld [vmem:[%s2 + $0x8] sm:$0xff]
  %v1283 = vld [vmem:[%s2 + $0x10] sm:$0xff]
  %v1284 = vld [vmem:[%s2 + $0x18] sm:$0xff]
  %v1285 = vld [vmem:[%s2 + $0x20] sm:$0xff]
  %v1286 = vld [vmem:[%s2 + $0x28] sm:$0xff]
  %v1287 = vld [vmem:[%s2 + $0x30] sm:$0xff]
  %v1288 = vld [vmem:[%s2 + $0x38] sm:$0xff]
  %v1289 = vld [vmem:[%s2 + $0x40] sm:$0xff]
  %v1290 = vld [vmem:[%s2 + $0x48] sm:$0xff]
  %v1291 = vld [vmem:[%s2 + $0x50] sm:$0xff]
  %v1292 = vld [vmem:[%s2 + $0x58] sm:$0xff]
  %v1293 = vld [vmem:[%s2 + $0x60] sm:$0xff]
  %v1294 = vld [vmem:[%s2 + $0x68] sm:$0xff]
  %v1295 = vld [vmem:[%s2 + $0x70] sm:$0xff]
  %v1296 = vld [vmem:[%s2 + $0x78] sm:$0xff]
  %v1297 = vld [vmem:[%s2 + $0x80] sm:$0xff]
  %v1298 = vld [vmem:[%s2 + $0x88] sm:$0xff]
  %v1299 = vld [vmem:[%s2 + $0x90] sm:$0xff]
  %v1300 = vld [vmem:[%s2 + $0x98] sm:$0xff]
  %v1301 = vld [vmem:[%s2 + $0xa0] sm:$0xff]
  %v1302 = vld [vmem:[%s2 + $0xa8] sm:$0xff]
  %v1303 = vld [vmem:[%s2 + $0xb0] sm:$0xff]
  %v1304 = vld [vmem:[%s2 + $0xb8] sm:$0xff]
  %v1305 = vld [vmem:[%s2 + $0xc0] sm:$0xff]
  %v1306 = vld [vmem:[%s2 + $0xc8] sm:$0xff]
  %v1307 = vld [vmem:[%s2 + $0xd0] sm:$0xff]
  %v1308 = vld [vmem:[%s2 + $0xd8] sm:$0xff]
  %v1309 = vld [vmem:[%s2 + $0xe0] sm:$0xff]
  %v1310 = vld [vmem:[%s2 + $0xe8] sm:$0xff]
  %v1311 = vld [vmem:[%s2 + $0xf0] sm:$0xff]
  %v1312 = vld [vmem:[%s2 + $0xf8] sm:$0xff]
  %v1313 = vld [vmem:[%s2 + $0x100] sm:$0xff]
  %v1314 = vld [vmem:[%s2 + $0x108] sm:$0xff]
  %v1315 = vld [vmem:[%s2 + $0x110] sm:$0xff]
  %v1316 = vld [vmem:[%s2 + $0x118] sm:$0xff]
  %v1317 = vld [vmem:[%s2 + $0x120] sm:$0xff]
  %v1318 = vld [vmem:[%s2 + $0x128] sm:$0xff]
  %v1319 = vld [vmem:[%s2 + $0x130] sm:$0xff]
  %v1320 = vld [vmem:[%s2 + $0x138] sm:$0xff]
  %v1321 = vld [vmem:[%s2 + $0x140] sm:$0xff]
  %v1322 = vld [vmem:[%s2 + $0x148] sm:$0xff]
  %v1323 = vld [vmem:[%s2 + $0x150] sm:$0xff]
  %v1324 = vld [vmem:[%s2 + $0x158] sm:$0xff]
  %v1325 = vld [vmem:[%s2 + $0x160] sm:$0xff]
  %v1326 = vld [vmem:[%s2 + $0x168] sm:$0xff]
  %v1327 = vld [vmem:[%s2 + $0x170] sm:$0xff]
  %v1328 = vld [vmem:[%s2 + $0x178] sm:$0xff]
  %v1329 = vld [vmem:[%s2 + $0x180] sm:$0x1]
  %v1330 = vlaneseq
  %v1331 = vshrl.u32 %v1330, 7
  %v1332 = vsub.s32 0, %v1331
  %v1333 = vrot.slane %v1329, %v1332
  %1334 = vmatprep.subr.mxu0 0.0
  %1335 = vmatpush1.msra.mxu0 %v1281
  %1336 = vmatprep.subr.mxu0 0.0
  %1337 = vmatpush1.msra.mxu0 %v1282
  %1338 = vmatprep.subr.mxu0 0.0
  %1339 = vmatpush1.msra.mxu0 %v1283
  %1340 = vmatprep.subr.mxu0 0.0
  %1341 = vmatpush1.msra.mxu0 %v1284
  %1342 = vmatprep.subr.mxu0 0.0
  %1343 = vmatpush1.msra.mxu0 %v1285
  %1344 = vmatprep.subr.mxu0 0.0
  %1345 = vmatpush1.msra.mxu0 %v1286
  %1346 = vmatprep.subr.mxu0 0.0
  %1347 = vmatpush1.msra.mxu0 %v1287
  %1348 = vmatprep.subr.mxu0 0.0
  %1349 = vmatpush1.msra.mxu0 %v1288
  %1350 = vmatprep.subr.mxu0 0.0
  %1351 = vmatpush1.msra.mxu0 %v1289
  %1352 = vmatprep.subr.mxu0 0.0
  %1353 = vmatpush1.msra.mxu0 %v1290
  %1354 = vmatprep.subr.mxu0 0.0
  %1355 = vmatpush1.msra.mxu0 %v1291
  %1356 = vmatprep.subr.mxu0 0.0
  %1357 = vmatpush1.msra.mxu0 %v1292
  %1358 = vmatprep.subr.mxu0 0.0
  %1359 = vmatpush1.msra.mxu0 %v1293
  %1360 = vmatprep.subr.mxu0 0.0
  %1361 = vmatpush1.msra.mxu0 %v1294
  %1362 = vmatprep.subr.mxu0 0.0
  %1363 = vmatpush1.msra.mxu0 %v1295
  %1364 = vmatprep.subr.mxu0 0.0
  %1365 = vmatpush1.msra.mxu0 %v1296
  %1366 = vmatprep.subr.mxu0 0.0
  %1367 = vmatpush1.msra.mxu0 %v1297
  %1368 = vmatprep.subr.mxu0 0.0
  %1369 = vmatpush1.msra.mxu0 %v1298
  %1370 = vmatprep.subr.mxu0 0.0
  %1371 = vmatpush1.msra.mxu0 %v1299
  %1372 = vmatprep.subr.mxu0 0.0
  %1373 = vmatpush1.msra.mxu0 %v1300
  %1374 = vmatprep.subr.mxu0 0.0
  %1375 = vmatpush1.msra.mxu0 %v1301
  %1376 = vmatprep.subr.mxu0 0.0
  %1377 = vmatpush1.msra.mxu0 %v1302
  %1378 = vmatprep.subr.mxu0 0.0
  %1379 = vmatpush1.msra.mxu0 %v1303
  %1380 = vmatprep.subr.mxu0 0.0
  %1381 = vmatpush1.msra.mxu0 %v1304
  %1382 = vmatprep.subr.mxu0 0.0
  %1383 = vmatpush1.msra.mxu0 %v1305
  %1384 = vmatprep.subr.mxu0 0.0
  %1385 = vmatpush1.msra.mxu0 %v1306
  %1386 = vmatprep.subr.mxu0 0.0
  %1387 = vmatpush1.msra.mxu0 %v1307
  %1388 = vmatprep.subr.mxu0 0.0
  %1389 = vmatpush1.msra.mxu0 %v1308
  %1390 = vmatprep.subr.mxu0 0.0
  %1391 = vmatpush1.msra.mxu0 %v1309
  %1392 = vmatprep.subr.mxu0 0.0
  %1393 = vmatpush1.msra.mxu0 %v1310
  %1394 = vmatprep.subr.mxu0 0.0
  %1395 = vmatpush1.msra.mxu0 %v1311
  %1396 = vmatprep.subr.mxu0 0.0
  %1397 = vmatpush1.msra.mxu0 %v1312
  %1398 = vmatprep.mubr.f32.mxu0 %v1280
  %1399 = vmatmul.mubr.f32.gmra.mrb[0].mxu0 %v1277
  %v1400 = vpop.f32.mrb[0].mxu0
  %v1401 = vadd.f32 %v1333, %v1400
  %v1402 = vpop.f32.mrb[0].mxu0
  %1403 = vdwg.mxu0
  %v1404 = vmax.f32 %v1401, 0.0
  %1405 = vmatprep.subr.mxu0 0.0
  %1406 = vmatpush1.msra.mxu0 %v1313
  %1407 = vmatprep.subr.mxu0 0.0
  %1408 = vmatpush1.msra.mxu0 %v1314
  %1409 = vmatprep.subr.mxu0 0.0
  %1410 = vmatpush1.msra.mxu0 %v1315
  %1411 = vmatprep.subr.mxu0 0.0
  %1412 = vmatpush1.msra.mxu0 %v1316
  %1413 = vmatprep.subr.mxu0 0.0
  %1414 = vmatpush1.msra.mxu0 %v1317
  %1415 = vmatprep.subr.mxu0 0.0
  %1416 = vmatpush1.msra.mxu0 %v1318
  %1417 = vmatprep.subr.mxu0 0.0
  %1418 = vmatpush1.msra.mxu0 %v1319
  %1419 = vmatprep.subr.mxu0 0.0
  %1420 = vmatpush1.msra.mxu0 %v1320
  %1421 = vmatprep.subr.mxu0 0.0
  %1422 = vmatpush1.msra.mxu0 %v1321
  %1423 = vmatprep.subr.mxu0 0.0
  %1424 = vmatpush1.msra.mxu0 %v1322
  %1425 = vmatprep.subr.mxu0 0.0
  %1426 = vmatpush1.msra.mxu0 %v1323
  %1427 = vmatprep.subr.mxu0 0.0
  %1428 = vmatpush1.msra.mxu0 %v1324
  %1429 = vmatprep.subr.mxu0 0.0
  %1430 = vmatpush1.msra.mxu0 %v1325
  %1431 = vmatprep.subr.mxu0 0.0
  %1432 = vmatpush1.msra.mxu0 %v1326
  %1433 = vmatprep.subr.mxu0 0.0
  %1434 = vmatpush1.msra.mxu0 %v1327
  %1435 = vmatprep.subr.mxu0 0.0
  %1436 = vmatpush1.msra.mxu0 %v1328
  %1437 = vmatprep.subr.mxu0 0.0
  %1438 = vmatpush1.msra.mxu0 0.0
  %1439 = vmatprep.subr.mxu0 0.0
  %1440 = vmatpush1.msra.mxu0 0.0
  %1441 = vmatprep.subr.mxu0 0.0
  %1442 = vmatpush1.msra.mxu0 0.0
  %1443 = vmatprep.subr.mxu0 0.0
  %1444 = vmatpush1.msra.mxu0 0.0
  %1445 = vmatprep.subr.mxu0 0.0
  %1446 = vmatpush1.msra.mxu0 0.0
  %1447 = vmatprep.subr.mxu0 0.0
  %1448 = vmatpush1.msra.mxu0 0.0
  %1449 = vmatprep.subr.mxu0 0.0
  %1450 = vmatpush1.msra.mxu0 0.0
  %1451 = vmatprep.subr.mxu0 0.0
  %1452 = vmatpush1.msra.mxu0 0.0
  %1453 = vmatprep.subr.mxu0 0.0
  %1454 = vmatpush1.msra.mxu0 0.0
  %1455 = vmatprep.subr.mxu0 0.0
  %1456 = vmatpush1.msra.mxu0 0.0
  %1457 = vmatprep.subr.mxu0 0.0
  %1458 = vmatpush1.msra.mxu0 0.0
  %1459 = vmatprep.subr.mxu0 0.0
  %1460 = vmatpush1.msra.mxu0 0.0
  %1461 = vmatprep.subr.mxu0 0.0
  %1462 = vmatpush1.msra.mxu0 0.0
  %1463 = vmatprep.subr.mxu0 0.0
  %1464 = vmatpush1.msra.mxu0 0.0
  %1465 = vmatprep.subr.mxu0 0.0
  %1466 = vmatpush1.msra.mxu0 0.0
  %1467 = vmatprep.subr.mxu0 0.0
  %1468 = vmatpush1.msra.mxu0 0.0
  %1469 = vmatprep.mubr.f32.mxu0 0.0
  %1470 = vmatmul.mubr.f32.gmra.mrb[0].mxu0 %v1404
  %v1471 = vpop.f32.mrb[0].mxu0
  %v1472 = vadd.f32 0.0, %v1471
  %v1473 = vpop.f32.mrb[0].mxu0
  %1474 = vdwg.mxu0
  %vm1475 = vcmask 64512
  %v1476 = vsel %vm1475, %v1472, -inf
  %1477 = vmax.xlane.f32.xlu0 %v1476
  %v1478 = vpop.xlane.xlu0 %1477
  %v1479 = vsub.f32 %v1472, %v1478
  %v1480 = vmul.f32 %v1479, 1.442695
  %v1481 = vpow.pop %v1480
  %v1482 = vsel %vm1475, %v1481, 0.0
  %1483 = vadd.xlane.f32.xlu0 %v1482
  %v1484 = vpop.xlane.xlu0 %1483
  %v1485 = vrcp.pop %v1484
  %v1486 = vmul.f32 %v1481, %v1485
  %1487 = vst.msk [vmem:[%s5] sm:$0xff] %vm1475, %v1486
  %1489 = vset.pattern.permute.xlu0 0
  %1490 = vperm.xlu0 %1489, %v1486
  %v1491 = vpop.permute.xlu0 %1490
  %v1493 = vmul.f32 %v317, %v1491
  %1494 = vset.pattern.permute.xlu0 1
  %1495 = vperm.xlu0 %1494, %v1486
  %v1496 = vpop.permute.xlu0 %1495
  %v1498 = vmul.f32 %v452, %v1496
  %v1499 = vadd.f32 %v1493, %v1498
  %1500 = vset.pattern.permute.xlu0 2
  %1501 = vperm.xlu0 %1500, %v1486
  %v1502 = vpop.permute.xlu0 %1501
  %v1504 = vmul.f32 %v587, %v1502
  %v1505 = vadd.f32 %v1499, %v1504
  %1506 = vset.pattern.permute.xlu0 3
  %1507 = vperm.xlu0 %1506, %v1486
  %v1508 = vpop.permute.xlu0 %1507
  %v1510 = vmul.f32 %v722, %v1508
  %v1511 = vadd.f32 %v1505, %v1510
  %1512 = vset.pattern.permute.xlu0 4
  %1513 = vperm.xlu0 %1512, %v1486
  %v1514 = vpop.permute.xlu0 %1513
  %v1516 = vmul.f32 %v857, %v1514
  %v1517 = vadd.f32 %v1511, %v1516
  %1518 = vset.pattern.permute.xlu0 5
  %1519 = vperm.xlu0 %1518, %v1486
  %v1520 = vpop.permute.xlu0 %1519
  %v1522 = vmul.f32 %v992, %v1520
  %v1523 = vadd.f32 %v1517, %v1522
  %1524 = vset.pattern.permute.xlu0 6
  %1525 = vperm.xlu0 %1524, %v1486
  %v1526 = vpop.permute.xlu0 %1525
  %v1528 = vmul.f32 %v1127, %v1526
  %v1529 = vadd.f32 %v1523, %v1528
  %1530 = vset.pattern.permute.xlu0 7
  %1531 = vperm.xlu0 %1530, %v1486
  %v1532 = vpop.permute.xlu0 %1531
  %v1534 = vmul.f32 %v1261, %v1532
  %v1535 = vadd.f32 %v1529, %v1534
  %v1536 = vld [vmem:[%s3 + $0x8] sm:$0xff]
  %v1537 = vld [vmem:[%s3 + $0x10] sm:$0xff]
  %v1538 = vld [vmem:[%s3 + $0x18] sm:$0xff]
  %v1539 = vld [vmem:[%s3 + $0x20] sm:$0xff]
  %v1540 = vld [vmem:[%s3 + $0x2] sm:$0x1]
  %v1541 = vlaneseq
  %v1542 = vshrl.u32 %v1541, 7
  %v1543 = vsub.s32 0, %v1542
  %v1544 = vrot.slane %v1540, %v1543
  %1546 = vrot.lane.b32.xlu0 %v1535, 32
  %v1547 = vpop.permute.xlu0 %1546
  %v1548 = vsel %vm211, %v1547, 0
  %1550 = vmatprep.subr.mxu0 0.0
  %1551 = vmatpush1.msra.mxu0 %v1536
  %1552 = vmatprep.subr.mxu0 0.0
  %1553 = vmatpush1.msra.mxu0 %v1537
  %1554 = vmatprep.subr.mxu0 0.0
  %1555 = vmatpush1.msra.mxu0 %v1538
  %1556 = vmatprep.subr.mxu0 0.0
  %1557 = vmatpush1.msra.mxu0 %v1539
  %1558 = vmatprep.subr.mxu0 0.0
  %1559 = vmatpush1.msra.mxu0 0.0
  %1560 = vmatprep.subr.mxu0 0.0
  %1561 = vmatpush1.msra.mxu0 0.0
  %1562 = vmatprep.subr.mxu0 0.0
  %1563 = vmatpush1.msra.mxu0 0.0
  %1564 = vmatprep.subr.mxu0 0.0
  %1565 = vmatpush1.msra.mxu0 0.0
  %1566 = vmatprep.subr.mxu0 0.0
  %1567 = vmatpush1.msra.mxu0 0.0
  %1568 = vmatprep.subr.mxu0 0.0
  %1569 = vmatpush1.msra.mxu0 0.0
  %1570 = vmatprep.subr.mxu0 0.0
  %1571 = vmatpush1.msra.mxu0 0.0
  %1572 = vmatprep.subr.mxu0 0.0
  %1573 = vmatpush1.msra.mxu0 0.0
  %1574 = vmatprep.subr.mxu0 0.0
  %1575 = vmatpush1.msra.mxu0 0.0
  %1576 = vmatprep.subr.mxu0 0.0
  %1577 = vmatpush1.msra.mxu0 0.0
  %1578 = vmatprep.subr.mxu0 0.0
  %1579 = vmatpush1.msra.mxu0 0.0
  %1580 = vmatprep.subr.mxu0 0.0
  %1581 = vmatpush1.msra.mxu0 0.0
  %1582 = vmatprep.subr.mxu0 0.0
  %1583 = vmatpush1.msra.mxu0 0.0
  %1584 = vmatprep.subr.mxu0 0.0
  %1585 = vmatpush1.msra.mxu0 0.0
  %1586 = vmatprep.subr.mxu0 0.0
  %1587 = vmatpush1.msra.mxu0 0.0
  %1588 = vmatprep.subr.mxu0 0.0
  %1589 = vmatpush1.msra.mxu0 0.0
  %1590 = vmatprep.subr.mxu0 0.0
  %1591 = vmatpush1.msra.mxu0 0.0
  %1592 = vmatprep.subr.mxu0 0.0
  %1593 = vmatpush1.msra.mxu0 0.0
  %1594 = vmatprep.subr.mxu0 0.0
  %1595 = vmatpush1.msra.mxu0 0.0
  %1596 = vmatprep.subr.mxu0 0.0
  %1597 = vmatpush1.msra.mxu0 0.0
  %1598 = vmatprep.subr.mxu0 0.0
  %1599 = vmatpush1.msra.mxu0 0.0
  %1600 = vmatprep.subr.mxu0 0.0
  %1601 = vmatpush1.msra.mxu0 0.0
  %1602 = vmatprep.subr.mxu0 0.0
  %1603 = vmatpush1.msra.mxu0 0.0
  %1604 = vmatprep.subr.mxu0 0.0
  %1605 = vmatpush1.msra.mxu0 0.0
  %1606 = vmatprep.subr.mxu0 0.0
  %1607 = vmatpush1.msra.mxu0 0.0
  %1608 = vmatprep.subr.mxu0 0.0
  %1609 = vmatpush1.msra.mxu0 0.0
  %1610 = vmatprep.subr.mxu0 0.0
  %1611 = vmatpush1.msra.mxu0 0.0
  %1612 = vmatprep.subr.mxu0 0.0
  %1613 = vmatpush1.msra.mxu0 0.0
  %1614 = vmatprep.mubr.f32.mxu0 0.0
  %1615 = vmatmul.mubr.f32.gmra.mrb[0].mxu0 %v1548
  %v1616 = vpop.f32.mrb[0].mxu0
  %v1617 = vadd.f32 %v1544, %v1616
  %v1618 = vpop.f32.mrb[0].mxu0
  %1619 = vdwg.mxu0
  %v1620 = vmax.f32 %v1617, 0.0
  %1625 = vrot.lane.b32.xlu0 %v1536, 96
  %v1626 = vpop.permute.xlu0 %1625
  %1627 = vrot.lane.b32.xlu0 %v1537, 96
  %v1628 = vpop.permute.xlu0 %1627
  %1629 = vrot.lane.b32.xlu0 %v1538, 96
  %v1630 = vpop.permute.xlu0 %1629
  %1631 = vrot.lane.b32.xlu0 %v1539, 96
  %v1632 = vpop.permute.xlu0 %1631
  %1638 = vrot.lane.b32.xlu0 %v1544, 96
  %v1639 = vpop.permute.xlu0 %1638
  %v1642 = vsel %vm211, %v1620, 0
  %1644 = vmatprep.subr.mxu0 0.0
  %1645 = vmatpush1.msra.mxu0 %v1626
  %1646 = vmatprep.subr.mxu0 0.0
  %1647 = vmatpush1.msra.mxu0 %v1628
  %1648 = vmatprep.subr.mxu0 0.0
  %1649 = vmatpush1.msra.mxu0 %v1630
  %1650 = vmatprep.subr.mxu0 0.0
  %1651 = vmatpush1.msra.mxu0 %v1632
  %1652 = vmatprep.subr.mxu0 0.0
  %1653 = vmatpush1.msra.mxu0 0.0
  %1654 = vmatprep.subr.mxu0 0.0
  %1655 = vmatpush1.msra.mxu0 0.0
  %1656 = vmatprep.subr.mxu0 0.0
  %1657 = vmatpush1.msra.mxu0 0.0
  %1658 = vmatprep.subr.mxu0 0.0
  %1659 = vmatpush1.msra.mxu0 0.0
  %1660 = vmatprep.subr.mxu0 0.0
  %1661 = vmatpush1.msra.mxu0 0.0
  %1662 = vmatprep.subr.mxu0 0.0
  %1663 = vmatpush1.msra.mxu0 0.0
  %1664 = vmatprep.subr.mxu0 0.0
  %1665 = vmatpush1.msra.mxu0 0.0
  %1666 = vmatprep.subr.mxu0 0.0
  %1667 = vmatpush1.msra.mxu0 0.0
  %1668 = vmatprep.subr.mxu0 0.0
  %1669 = vmatpush1.msra.mxu0 0.0
  %1670 = vmatprep.subr.mxu0 0.0
  %1671 = vmatpush1.msra.mxu0 0.0
  %1672 = vmatprep.subr.mxu0 0.0
  %1673 = vmatpush1.msra.mxu0 0.0
  %1674 = vmatprep.subr.mxu0 0.0
  %1675 = vmatpush1.msra.mxu0 0.0
  %1676 = vmatprep.subr.mxu0 0.0
  %1677 = vmatpush1.msra.mxu0 0.0
  %1678 = vmatprep.subr.mxu0 0.0
  %1679 = vmatpush1.msra.mxu0 0.0
  %1680 = vmatprep.subr.mxu0 0.0
  %1681 = vmatpush1.msra.mxu0 0.0
  %1682 = vmatprep.subr.mxu0 0.0
  %1683 = vmatpush1.msra.mxu0 0.0
  %1684 = vmatprep.subr.mxu0 0.0
  %1685 = vmatpush1.msra.mxu0 0.0
  %1686 = vmatprep.subr.mxu0 0.0
  %1687 = vmatpush1.msra.mxu0 0.0
  %1688 = vmatprep.subr.mxu0 0.0
  %1689 = vmatpush1.msra.mxu0 0.0
  %1690 = vmatprep.subr.mxu0 0.0
  %1691 = vmatpush1.msra.mxu0 0.0
  %1692 = vmatprep.subr.mxu0 0.0
  %1693 = vmatpush1.msra.mxu0 0.0
  %1694 = vmatprep.subr.mxu0 0.0
  %1695 = vmatpush1.msra.mxu0 0.0
  %1696 = vmatprep.subr.mxu0 0.0
  %1697 = vmatpush1.msra.mxu0 0.0
  %1698 = vmatprep.subr.mxu0 0.0
  %1699 = vmatpush1.msra.mxu0 0.0
  %1700 = vmatprep.subr.mxu0 0.0
  %1701 = vmatpush1.msra.mxu0 0.0
  %1702 = vmatprep.subr.mxu0 0.0
  %1703 = vmatpush1.msra.mxu0 0.0
  %1704 = vmatprep.subr.mxu0 0.0
  %1705 = vmatpush1.msra.mxu0 0.0
  %1706 = vmatprep.subr.mxu0 0.0
  %1707 = vmatpush1.msra.mxu0 0.0
  %1708 = vmatprep.mubr.f32.mxu0 0.0
  %1709 = vmatmul.mubr.f32.gmra.mrb[0].mxu0 %v1642
  %v1710 = vpop.f32.mrb[0].mxu0
  %v1711 = vadd.f32 %v1639, %v1710
  %v1712 = vpop.f32.mrb[0].mxu0
  %1713 = vdwg.mxu0
  %vm1714 = vcmask 15360
  %1715 = vst.msk [vmem:[%s4] sm:$0xff] %vm1714, %v1711
  // Predicated region
  $region18: #{custom_net_forward.1} parent=0 // pred_check
    _
  $region19: #{custom_net_forward.1} parent=0 // pred_check_branch
    %1717 = sbr.rel (0) target = $region21
  $region20: #{custom_net_forward.1} parent=0 // pred_region
    _
  $region21: #{custom_net_forward.1} parent=0 // pred_fallthru
    _
  // Predicated region
  $region22: #{custom_net_forward.1} parent=0 // pred_check
    _
  $region23: #{custom_net_forward.1} parent=0 // pred_check_branch
    %1719 = sbr.rel (0) target = $region25
  $region24: #{custom_net_forward.1} parent=0 // pred_region
    _
  $region25: #{custom_net_forward.1} parent=0 // pred_fallthru
    _
  // Predicated region
  $region26: #{custom_net_forward.1} parent=0 // pred_check
    _
  $region27: #{custom_net_forward.1} parent=0 // pred_check_branch
    %1721 = sbr.rel (0) target = $region29
  $region28: #{custom_net_forward.1} parent=0 // pred_region
    _
  $region29: #{custom_net_forward.1} parent=0 // pred_fallthru
    _
  // Predicated region
  $region30: #{custom_net_forward.1} parent=0 // pred_check
    _
  $region31: #{custom_net_forward.1} parent=0 // pred_check_branch
    %1723 = sbr.rel (0) target = $region33
  $region32: #{custom_net_forward.1} parent=0 // pred_region
    _
  $region33: #{custom_net_forward.1} parent=0 // pred_fallthru
    _

</llo_original>
